<compile_context>
chip_gen: v6e
topology: v6e:2x2x1
jax: 0.10.0
libtpu: 0.0.40
codegen_flags: <defaults>
</compile_context>

<pallas_src>
import functools

import jax
import jax.numpy as jnp
from jax.experimental import pallas as pl
from jax.experimental.pallas import tpu as pltpu

LANE = 128


def _round_up(x, m):
    return ((x + m - 1) // m) * m


def _vmem_limit_bytes():
    """Generation-aware VMEM budget (v7x has 64 MiB, v5e/v6e have 128 MiB)."""
    cap = None
    try:
        cap = getattr(pltpu.get_tpu_info(), "vmem_capacity_bytes", None)
    except Exception:  # pragma: no cover - conservative fallback off-TPU
        cap = None
    if not cap:
        cap = 128 * 1024 * 1024
    # Leave headroom for Mosaic internal scratch; cap at 110 MiB on 128 MiB parts.
    return int(min(max(cap - (16 << 20), 32 << 20), 110 << 20))


def _pick_tiles(n):
    """Return (n_pad, tm, tk): output-row tile and contraction (A-column) tile."""
    n_pad = _round_up(n, LANE)
    if n_pad <= 128:
        return n_pad, n_pad, n_pad            # tiny graph: single tile
    if n_pad <= 2048:
        n_pad = _round_up(n, 256)
        return n_pad, n_pad // 2, n_pad       # >=2 row tiles (v7x megacore)
    n_pad = _round_up(n, 1024)
    return n_pad, 512, 1024                   # 512x1024 int8 A block = 512 KiB


# ----------------------------- Pallas kernels ------------------------------

def _norm_xw_kernel(x_ref, dinv_ref, w_ref, y_ref):
    # Fused LayerNormalization (L2 row norm, eps=1e-4) + fold of the source-side
    # d^-1/2 + feature transform X_norm @ W.
    x = x_ref[...].astype(jnp.float32)
    sq = jnp.sum(x * x, axis=1, keepdims=True)
    scale = dinv_ref[...] / (jnp.sqrt(sq) + 1e-4)     # d_j^-1/2 / (||x_j|| + eps)
    xn = (x * scale).astype(jnp.bfloat16)             # bf16 into the MXU
    y_ref[...] = jnp.dot(
        xn, w_ref[...], preferred_element_type=jnp.float32
    ).astype(y_ref.dtype)


def norm_then_matmul(x_pad, dinv_pad, w_pad, tm, vmem_limit):
    """Y = (d^-1/2 * L2norm(X)) @ W, row-tiled; output bf16 (halves HBM traffic)."""
    n_pad, c_in = x_pad.shape
    c_out = w_pad.shape[1]
    return pl.pallas_call(
        _norm_xw_kernel,
        out_shape=jax.ShapeDtypeStruct((n_pad, c_out), jnp.bfloat16),
        grid=(n_pad // tm,),
        in_specs=[
            pl.BlockSpec((tm, c_in), lambda i: (i, 0)),
            pl.BlockSpec((tm, 1), lambda i: (i, 0)),
            pl.BlockSpec((c_in, c_out), lambda i: (0, 0)),
        ],
        out_specs=pl.BlockSpec((tm, c_out), lambda i: (i, 0)),
        compiler_params=pltpu.CompilerParams(
            dimension_semantics=("parallel",),
            vmem_limit_bytes=vmem_limit,
        ),
    )(x_pad, dinv_pad, w_pad)


def _agg_kernel(a_ref, y_ref, dinv_ref, b_ref, o_ref, acc_ref, *, tk, y_resident):
    # X' = d^-1/2 * (A_int8 @ Y) + b, accumulated over the K (A-column) grid axis.
    k = pl.program_id(1)

    @pl.when(k == 0)
    def _():
        acc_ref[...] = jnp.zeros_like(acc_ref)

    a = a_ref[...].astype(jnp.bfloat16)               # int8 counts -> bf16 (exact)
    if y_resident:
        off = pl.multiple_of(k * tk, LANE)
        y = y_ref[pl.ds(off, tk), :]                  # slice the VMEM-resident Y
    else:
        y = y_ref[...]
    acc_ref[...] += jnp.dot(a, y, preferred_element_type=jnp.float32)

    @pl.when(k == pl.num_programs(1) - 1)
    def _():
        o_ref[...] = (acc_ref[...] * dinv_ref[...] + b_ref[...]).astype(o_ref.dtype)


def aggregate(a_pad, y, dinv_pad, b_pad, tm, tk, vmem_limit):
    """Tiled aggregation: rows of A 'parallel', contraction 'arbitrary'."""
    n_pad = a_pad.shape[0]
    c_out = y.shape[1]
    # Keep Y fully VMEM-resident (fetched once, never re-read) when it fits.
    y_resident = (n_pad * c_out * 2) <= (vmem_limit // 4)
    if y_resident:
        y_spec = pl.BlockSpec((n_pad, c_out), lambda i, k: (0, 0))
    else:
        y_spec = pl.BlockSpec((tk, c_out), lambda i, k: (k, 0))
    kernel = functools.partial(_agg_kernel, tk=tk, y_resident=y_resident)
    return pl.pallas_call(
        kernel,
        out_shape=jax.ShapeDtypeStruct((n_pad, c_out), jnp.bfloat16),
        grid=(n_pad // tm, n_pad // tk),
        in_specs=[
            pl.BlockSpec((tm, tk), lambda i, k: (i, k)),
            y_spec,
            pl.BlockSpec((tm, 1), lambda i, k: (i, 0)),
            pl.BlockSpec((1, c_out), lambda i, k: (0, 0)),
        ],
        out_specs=pl.BlockSpec((tm, c_out), lambda i, k: (i, 0)),
        scratch_shapes=[pltpu.VMEM((tm, c_out), jnp.float32)],
        compiler_params=pltpu.CompilerParams(
            dimension_semantics=("parallel", "arbitrary"),
            vmem_limit_bytes=vmem_limit,
        ),
    )(a_pad, y, dinv_pad, b_pad)


# ------------------------------ JAX glue ------------------------------------

def build_adj_int8(edge_index, num_nodes, n_pad):
    """int8 (A+I) edge counts (duplicates summed, diagonal forced to 1) and
    d^-1/2 as an (n_pad, 1) f32 vector (padded rows -> 0)."""
    src, dst = edge_index[0], edge_index[1]
    off_diag = src != dst                               # PyG drops existing self-loops
    a = jnp.zeros((n_pad, n_pad), jnp.int8)
    # message flows source -> target, so row = target (dst).
    a = a.at[dst, src].add(off_diag.astype(jnp.int8))
    diag = jnp.arange(num_nodes)
    a = a.at[diag, diag].set(jnp.int8(1))               # fresh self-loops, weight 1
    deg = (
        jnp.zeros((num_nodes,), jnp.float32).at[dst].add(off_diag.astype(jnp.float32))
        + 1.0
    )
    dinv = jax.lax.rsqrt(deg)                           # deg >= 1 for real nodes
    dinv_pad = jnp.zeros((n_pad, 1), jnp.float32).at[:num_nodes, 0].set(dinv)
    return a, dinv_pad


class GNNForwardPallas:
    """JAX/Pallas equivalent of GNNForward.forward (inference path)."""

    def __init__(self, layer_sizes, key):
        self.layer_sizes = list(layer_sizes)
        self.vmem_limit = _vmem_limit_bytes()
        self.params = []
        for i in range(len(layer_sizes) - 1):
            key, wk = jax.random.split(key)
            fan_in, fan_out = layer_sizes[i], layer_sizes[i + 1]
            bound = (6.0 / (fan_in + fan_out)) ** 0.5   # glorot-uniform, deterministic
            w = jax.random.uniform(wk, (fan_in, fan_out), jnp.float32, -bound, bound)
            c_in_p, c_out_p = _round_up(fan_in, LANE), _round_up(fan_out, LANE)
            w_pad = (
                jnp.zeros((c_in_p, c_out_p), jnp.bfloat16)
                .at[:fan_in, :fan_out]
                .set(w.astype(jnp.bfloat16))
            )
            b_pad = jnp.zeros((1, c_out_p), jnp.float32)  # GCNConv bias, zero-init
            self.params.append((w_pad, b_pad))
        self._fwd = jax.jit(self._forward_impl)

    def _forward_impl(self, x, edge_index, params):
        n = x.shape[0]
        n_pad, tm, tk = _pick_tiles(n)
        a_pad, dinv_pad = build_adj_int8(edge_index, n, n_pad)
        c_in_p = _round_up(self.layer_sizes[0], LANE)
        x_pad = (
            jnp.zeros((n_pad, c_in_p), jnp.float32)
            .at[:n, : x.shape[1]]
            .set(x.astype(jnp.float32))
        )
        for (w_pad, b_pad) in params:
            y = norm_then_matmul(x_pad, dinv_pad, w_pad, tm, self.vmem_limit)
            x_pad = aggregate(a_pad, y, dinv_pad, b_pad, tm, tk, self.vmem_limit)
        return x_pad[:n, : self.layer_sizes[-1]].astype(jnp.float32)

    def forward(self, x, edge_index):
        return self._fwd(x, edge_index, self.params)


# ------------------------------- main ---------------------------------------

if __name__ == "__main__":
    key = jax.random.PRNGKey(0)
    k_x, k_e, k_p = jax.random.split(key, 3)

    num_nodes = 32
    num_edges = 64
    layer_sizes = [8, 32, 16]   # -> [LN, GCN(8->32), LN, GCN(32->16)]

    x = jax.random.normal(k_x, (num_nodes, layer_sizes[0]), dtype=jnp.float32)
    edge_index = jax.random.randint(k_e, (2, num_edges), 0, num_nodes, dtype=jnp.int32)

    model = GNNForwardPallas(layer_sizes, k_p)
    z = model.forward(x, edge_index)
    jax.block_until_ready(z)

    assert z.shape == (num_nodes, layer_sizes[-1]), z.shape
    assert bool(jnp.all(jnp.isfinite(z)))
    print("KERNEL_OK")
</pallas_src>

<mosaic_0001>
module attributes {stable_mosaic.version = 11 : i64} {
  func.func private @main(%arg0: i32) attributes {dimension_semantics = [#tpu.dimension_semantics<core_parallel>], iteration_bounds = array<i64: 2>, tpu.core_type = #tpu.core_type<sc_scalar_subcore>, window_params = []} {
    return
  }
}

module attributes {stable_mosaic.version = 11 : i64} {
  func.func private @main(%arg0: i32) attributes {dimension_semantics = [#tpu.dimension_semantics<core_parallel>], iteration_bounds = array<i64: 2>, tpu.core_type = #tpu.core_type<sc_scalar_subcore>, window_params = []} {
    return
  }
}

module attributes {stable_mosaic.version = 11 : i64} {
  func.func @_norm_xw_kernel(%arg0: i32, %arg1: memref<128x128xf32, #tpu.memory_space<vmem>>, %arg2: memref<128x1xf32, #tpu.memory_space<vmem>>, %arg3: memref<128x128xbf16, #tpu.memory_space<vmem>>, %arg4: memref<128x128xbf16, #tpu.memory_space<vmem>>) attributes {dimension_semantics = [#tpu.dimension_semantics<parallel>], iteration_bounds = array<i64: 1>, scalar_prefetch = 0 : i64, scratch_operands = 0 : i64, tpu.core_type = #tpu.core_type<tc>, window_params = [{transform_indices = @transform_0, window_bounds = array<i64: 128, 128>}, {transform_indices = @transform_1, window_bounds = array<i64: 128, 1>}, {pipeline_mode = #tpu.pipeline_mode<synchronous>, transform_indices = @transform_2, window_bounds = array<i64: 128, 128>}, {transform_indices = @transform_3, window_bounds = array<i64: 128, 128>}]} {
    %c0 = arith.constant 0 : index
    %c0_0 = arith.constant 0 : index
    %0 = vector.load %arg1[%c0, %c0_0] : memref<128x128xf32, #tpu.memory_space<vmem>>, vector<128x128xf32>
    %1 = arith.mulf %0, %0 : vector<128x128xf32>
    %cst = arith.constant dense<0.000000e+00> : vector<128xf32>
    %2 = vector.multi_reduction <add>, %1, %cst [1] : vector<128x128xf32> to vector<128xf32>
    %3 = vector.shape_cast %2 : vector<128xf32> to vector<128x1xf32>
    %c0_1 = arith.constant 0 : index
    %c0_2 = arith.constant 0 : index
    %4 = vector.load %arg2[%c0_1, %c0_2] : memref<128x1xf32, #tpu.memory_space<vmem>>, vector<128x1xf32>
    %5 = math.sqrt %3 : vector<128x1xf32>
    %cst_3 = arith.constant 9.99999974E-5 : f32
    %6 = vector.broadcast %cst_3 : f32 to vector<128x1xf32>
    %7 = arith.addf %5, %6 : vector<128x1xf32>
    %8 = arith.divf %4, %7 : vector<128x1xf32>
    %9 = vector.broadcast %8 : vector<128x1xf32> to vector<128x128xf32>
    %10 = arith.mulf %0, %9 : vector<128x128xf32>
    %11 = arith.truncf %10 : vector<128x128xf32> to vector<128x128xbf16>
    %c0_4 = arith.constant 0 : index
    %c0_5 = arith.constant 0 : index
    %12 = vector.load %arg3[%c0_4, %c0_5] : memref<128x128xbf16, #tpu.memory_space<vmem>>, vector<128x128xbf16>
    %cst_6 = arith.constant dense<0.000000e+00> : vector<128x128xf32>
    %13 = tpu.matmul %11, %12, %cst_6 {dimension_numbers = #tpu.dot_dimension_numbers<[1], [0], [0], [1], [0, 0, 1, 1], [], []>} : vector<128x128xbf16>, vector<128x128xbf16>, vector<128x128xf32> -> vector<128x128xf32>
    %14 = arith.truncf %13 : vector<128x128xf32> to vector<128x128xbf16>
    %c0_7 = arith.constant 0 : index
    %c0_8 = arith.constant 0 : index
    %15 = vector.load %arg4[%c0_7, %c0_8] : memref<128x128xbf16, #tpu.memory_space<vmem>>, vector<128x128xbf16>
    tpu.vector_store %arg4[%c0_7, %c0_8], %14 {strides = array<i32>} : memref<128x128xbf16, #tpu.memory_space<vmem>>, vector<128x128xbf16>,
    return
  }
  func.func @transform_0(%arg0: i32) -> (i32, i32) {
    %c0_i32 = arith.constant 0 : i32
    %c0_i32_0 = arith.constant 0 : i32
    return %arg0, %c0_i32 : i32, i32
  }
  func.func @transform_1(%arg0: i32) -> (i32, i32) {
    %c0_i32 = arith.constant 0 : i32
    %c0_i32_0 = arith.constant 0 : i32
    return %arg0, %c0_i32 : i32, i32
  }
  func.func @transform_2(%arg0: i32) -> (i32, i32) {
    %c0_i32 = arith.constant 0 : i32
    %c0_i32_0 = arith.constant 0 : i32
    %c0_i32_1 = arith.constant 0 : i32
    return %c0_i32, %c0_i32_0 : i32, i32
  }
  func.func @transform_3(%arg0: i32) -> (i32, i32) {
    %c0_i32 = arith.constant 0 : i32
    %c0_i32_0 = arith.constant 0 : i32
    return %arg0, %c0_i32 : i32, i32
  }
}

module attributes {stable_mosaic.version = 11 : i64} {
  func.func @_agg_kernel(%arg0: i32, %arg1: i32, %arg2: memref<128x128xi8, #tpu.memory_space<vmem>>, %arg3: memref<128x128xbf16, #tpu.memory_space<vmem>>, %arg4: memref<128x1xf32, #tpu.memory_space<vmem>>, %arg5: memref<1x128xf32, #tpu.memory_space<vmem>>, %arg6: memref<128x128xbf16, #tpu.memory_space<vmem>>, %arg7: memref<128x128xf32, #tpu.memory_space<vmem>>) attributes {dimension_semantics = [#tpu.dimension_semantics<parallel>, #tpu.dimension_semantics<arbitrary>], iteration_bounds = array<i64: 1, 1>, scalar_prefetch = 0 : i64, scratch_operands = 1 : i64, tpu.core_type = #tpu.core_type<tc>, window_params = [{transform_indices = @transform_0, window_bounds = array<i64: 128, 128>}, {pipeline_mode = #tpu.pipeline_mode<synchronous>, transform_indices = @transform_1, window_bounds = array<i64: 128, 128>}, {transform_indices = @transform_2, window_bounds = array<i64: 128, 1>}, {pipeline_mode = #tpu.pipeline_mode<synchronous>, transform_indices = @transform_3, window_bounds = array<i64: 1, 128>}, {transform_indices = @transform_4, window_bounds = array<i64: 128, 128>}]} {
    %c0_i32 = arith.constant 0 : i32
    %0 = arith.cmpi eq, %arg1, %c0_i32 : i32
    %1 = arith.extui %0 : i1 to i32
    %c0_i32_0 = arith.constant 0 : i32
    %2 = arith.cmpi ne, %1, %c0_i32_0 : i32
    scf.if %2 {
      %cst_9 = arith.constant 0.000000e+00 : f32
      %16 = vector.broadcast %cst_9 : f32 to vector<128x128xf32>
      %c0_10 = arith.constant 0 : index
      %c0_11 = arith.constant 0 : index
      %17 = vector.load %arg7[%c0_10, %c0_11] : memref<128x128xf32, #tpu.memory_space<vmem>>, vector<128x128xf32>
      tpu.vector_store %arg7[%c0_10, %c0_11], %16 {strides = array<i32>} : memref<128x128xf32, #tpu.memory_space<vmem>>, vector<128x128xf32>,
    } else {
    }
    %c0 = arith.constant 0 : index
    %c0_1 = arith.constant 0 : index
    %3 = vector.load %arg2[%c0, %c0_1] : memref<128x128xi8, #tpu.memory_space<vmem>>, vector<128x128xi8>
    %4 = arith.sitofp %3 : vector<128x128xi8> to vector<128x128xbf16>
    %c128_i32 = arith.constant 128 : i32
    %5 = arith.muli %arg1, %c128_i32 : i32
    %6 = tpu.assume_multiple %5, 128 : i32
    %7 = arith.index_cast %6 : i32 to index
    %c0_2 = arith.constant 0 : index
    %8 = vector.load %arg3[%7, %c0_2] : memref<128x128xbf16, #tpu.memory_space<vmem>>, vector<128x128xbf16>
    %c0_3 = arith.constant 0 : index
    %c0_4 = arith.constant 0 : index
    %9 = vector.load %arg7[%c0_3, %c0_4] : memref<128x128xf32, #tpu.memory_space<vmem>>, vector<128x128xf32>
    %cst = arith.constant dense<0.000000e+00> : vector<128x128xf32>
    %10 = tpu.matmul %4, %8, %cst {dimension_numbers = #tpu.dot_dimension_numbers<[1], [0], [0], [1], [0, 0, 1, 1], [], []>} : vector<128x128xbf16>, vector<128x128xbf16>, vector<128x128xf32> -> vector<128x128xf32>
    %11 = arith.addf %9, %10 : vector<128x128xf32>
    %c0_5 = arith.constant 0 : index
    %c0_6 = arith.constant 0 : index
    %12 = vector.load %arg7[%c0_5, %c0_6] : memref<128x128xf32, #tpu.memory_space<vmem>>, vector<128x128xf32>
    tpu.vector_store %arg7[%c0_5, %c0_6], %11 {strides = array<i32>} : memref<128x128xf32, #tpu.memory_space<vmem>>, vector<128x128xf32>,
    %c0_i32_7 = arith.constant 0 : i32
    %13 = arith.cmpi eq, %arg1, %c0_i32_7 : i32
    %14 = arith.extui %13 : i1 to i32
    %c0_i32_8 = arith.constant 0 : i32
    %15 = arith.cmpi ne, %14, %c0_i32_8 : i32
    scf.if %15 {
      %c0_9 = arith.constant 0 : index
      %c0_10 = arith.constant 0 : index
      %16 = vector.load %arg7[%c0_9, %c0_10] : memref<128x128xf32, #tpu.memory_space<vmem>>, vector<128x128xf32>
      %c0_11 = arith.constant 0 : index
      %c0_12 = arith.constant 0 : index
      %17 = vector.load %arg4[%c0_11, %c0_12] : memref<128x1xf32, #tpu.memory_space<vmem>>, vector<128x1xf32>
      %18 = vector.broadcast %17 : vector<128x1xf32> to vector<128x128xf32>
      %19 = arith.mulf %16, %18 : vector<128x128xf32>
      %c0_13 = arith.constant 0 : index
      %c0_14 = arith.constant 0 : index
      %20 = vector.load %arg5[%c0_13, %c0_14] : memref<1x128xf32, #tpu.memory_space<vmem>>, vector<1x128xf32>
      %21 = vector.broadcast %20 : vector<1x128xf32> to vector<128x128xf32>
      %22 = arith.addf %19, %21 : vector<128x128xf32>
      %23 = arith.truncf %22 : vector<128x128xf32> to vector<128x128xbf16>
      %c0_15 = arith.constant 0 : index
      %c0_16 = arith.constant 0 : index
      %24 = vector.load %arg6[%c0_15, %c0_16] : memref<128x128xbf16, #tpu.memory_space<vmem>>, vector<128x128xbf16>
      tpu.vector_store %arg6[%c0_15, %c0_16], %23 {strides = array<i32>} : memref<128x128xbf16, #tpu.memory_space<vmem>>, vector<128x128xbf16>,
    } else {
    }
    return
  }
  func.func @transform_0(%arg0: i32, %arg1: i32) -> (i32, i32) {
    %c0_i32 = arith.constant 0 : i32
    return %arg0, %arg1 : i32, i32
  }
  func.func @transform_1(%arg0: i32, %arg1: i32) -> (i32, i32) {
    %c0_i32 = arith.constant 0 : i32
    %c0_i32_0 = arith.constant 0 : i32
    %c0_i32_1 = arith.constant 0 : i32
    return %c0_i32, %c0_i32_0 : i32, i32
  }
  func.func @transform_2(%arg0: i32, %arg1: i32) -> (i32, i32) {
    %c0_i32 = arith.constant 0 : i32
    %c0_i32_0 = arith.constant 0 : i32
    return %arg0, %c0_i32 : i32, i32
  }
  func.func @transform_3(%arg0: i32, %arg1: i32) -> (i32, i32) {
    %c0_i32 = arith.constant 0 : i32
    %c0_i32_0 = arith.constant 0 : i32
    %c0_i32_1 = arith.constant 0 : i32
    return %c0_i32, %c0_i32_0 : i32, i32
  }
  func.func @transform_4(%arg0: i32, %arg1: i32) -> (i32, i32) {
    %c0_i32 = arith.constant 0 : i32
    %c0_i32_0 = arith.constant 0 : i32
    return %arg0, %c0_i32 : i32, i32
  }
}

module attributes {stable_mosaic.version = 11 : i64} {
  func.func @_norm_xw_kernel(%arg0: i32, %arg1: memref<128x128xbf16, #tpu.memory_space<vmem>>, %arg2: memref<128x1xf32, #tpu.memory_space<vmem>>, %arg3: memref<128x128xbf16, #tpu.memory_space<vmem>>, %arg4: memref<128x128xbf16, #tpu.memory_space<vmem>>) attributes {dimension_semantics = [#tpu.dimension_semantics<parallel>], iteration_bounds = array<i64: 1>, scalar_prefetch = 0 : i64, scratch_operands = 0 : i64, tpu.core_type = #tpu.core_type<tc>, window_params = [{transform_indices = @transform_0, window_bounds = array<i64: 128, 128>}, {transform_indices = @transform_1, window_bounds = array<i64: 128, 1>}, {pipeline_mode = #tpu.pipeline_mode<synchronous>, transform_indices = @transform_2, window_bounds = array<i64: 128, 128>}, {transform_indices = @transform_3, window_bounds = array<i64: 128, 128>}]} {
    %c0 = arith.constant 0 : index
    %c0_0 = arith.constant 0 : index
    %0 = vector.load %arg1[%c0, %c0_0] : memref<128x128xbf16, #tpu.memory_space<vmem>>, vector<128x128xbf16>
    %1 = arith.extf %0 : vector<128x128xbf16> to vector<128x128xf32>
    %2 = arith.mulf %1, %1 : vector<128x128xf32>
    %cst = arith.constant dense<0.000000e+00> : vector<128xf32>
    %3 = vector.multi_reduction <add>, %2, %cst [1] : vector<128x128xf32> to vector<128xf32>
    %4 = vector.shape_cast %3 : vector<128xf32> to vector<128x1xf32>
    %c0_1 = arith.constant 0 : index
    %c0_2 = arith.constant 0 : index
    %5 = vector.load %arg2[%c0_1, %c0_2] : memref<128x1xf32, #tpu.memory_space<vmem>>, vector<128x1xf32>
    %6 = math.sqrt %4 : vector<128x1xf32>
    %cst_3 = arith.constant 9.99999974E-5 : f32
    %7 = vector.broadcast %cst_3 : f32 to vector<128x1xf32>
    %8 = arith.addf %6, %7 : vector<128x1xf32>
    %9 = arith.divf %5, %8 : vector<128x1xf32>
    %10 = vector.broadcast %9 : vector<128x1xf32> to vector<128x128xf32>
    %11 = arith.mulf %1, %10 : vector<128x128xf32>
    %12 = arith.truncf %11 : vector<128x128xf32> to vector<128x128xbf16>
    %c0_4 = arith.constant 0 : index
    %c0_5 = arith.constant 0 : index
    %13 = vector.load %arg3[%c0_4, %c0_5] : memref<128x128xbf16, #tpu.memory_space<vmem>>, vector<128x128xbf16>
    %cst_6 = arith.constant dense<0.000000e+00> : vector<128x128xf32>
    %14 = tpu.matmul %12, %13, %cst_6 {dimension_numbers = #tpu.dot_dimension_numbers<[1], [0], [0], [1], [0, 0, 1, 1], [], []>} : vector<128x128xbf16>, vector<128x128xbf16>, vector<128x128xf32> -> vector<128x128xf32>
    %15 = arith.truncf %14 : vector<128x128xf32> to vector<128x128xbf16>
    %c0_7 = arith.constant 0 : index
    %c0_8 = arith.constant 0 : index
    %16 = vector.load %arg4[%c0_7, %c0_8] : memref<128x128xbf16, #tpu.memory_space<vmem>>, vector<128x128xbf16>
    tpu.vector_store %arg4[%c0_7, %c0_8], %15 {strides = array<i32>} : memref<128x128xbf16, #tpu.memory_space<vmem>>, vector<128x128xbf16>,
    return
  }
  func.func @transform_0(%arg0: i32) -> (i32, i32) {
    %c0_i32 = arith.constant 0 : i32
    %c0_i32_0 = arith.constant 0 : i32
    return %arg0, %c0_i32 : i32, i32
  }
  func.func @transform_1(%arg0: i32) -> (i32, i32) {
    %c0_i32 = arith.constant 0 : i32
    %c0_i32_0 = arith.constant 0 : i32
    return %arg0, %c0_i32 : i32, i32
  }
  func.func @transform_2(%arg0: i32) -> (i32, i32) {
    %c0_i32 = arith.constant 0 : i32
    %c0_i32_0 = arith.constant 0 : i32
    %c0_i32_1 = arith.constant 0 : i32
    return %c0_i32, %c0_i32_0 : i32, i32
  }
  func.func @transform_3(%arg0: i32) -> (i32, i32) {
    %c0_i32 = arith.constant 0 : i32
    %c0_i32_0 = arith.constant 0 : i32
    return %arg0, %c0_i32 : i32, i32
  }
}

</mosaic_0001>

<llo_original>
// kernel: _forward_impl.4
$region0: #{_forward_impl.4}
  #allocation0 [shape = 'u32[]', space=smem, size = 0x4, offset = 0x4, fixed_abs, tag = 'smem constant byte address 0x4 - core index']
  #allocation1 [shape = 'u32[144,128]{1,0:T(1,128)}', space=vmem, size = 0x12000, scoped, tag = 'internal scratch']
  %s0 = inlined_call_operand.vmem [shape: f32[128,128], index: 0, kind: input, shape index: {}]
  %s1 = inlined_call_operand.vmem [shape: f32[128,1], index: 1, kind: input, shape index: {}]
  %s2 = inlined_call_operand.vmem [shape: bf16[128,128], index: 2, kind: input, shape index: {}]
  %s3 = inlined_call_operand.vmem [shape: bf16[128,128], index: 3, kind: output, shape index: {}]
  %s4 = sld [smem:[#allocation0]]
  $region22: #{_forward_impl.4} parent=0
    _
  %s6 = ssub.s32 1, %s4
  %s7 = scalar_select 0, %s6, %s4
  // Predicated region
  $region2: #{_forward_impl.4} parent=0 // pred_check
    _
  $region3: #{_forward_impl.4} parent=0 // pred_check_branch
    %9 = sbr.rel (0) target = $region5
  $region4: #{_forward_impl.4} parent=0 // pred_region
    _
  $region5: #{_forward_impl.4} parent=0 // pred_fallthru
    _
  // Predicated region
  $region6: #{_forward_impl.4} parent=0 // pred_check
    _
  $region7: #{_forward_impl.4} parent=0 // pred_check_branch
    %11 = sbr.rel (0) target = $region9
  $region8: #{_forward_impl.4} parent=0 // pred_region
    _
  $region9: #{_forward_impl.4} parent=0 // pred_fallthru
    _
  // Predicated region
  $region10: #{_forward_impl.4} parent=0 // pred_check
    _
  $region11: #{_forward_impl.4} parent=0 // pred_check_branch
    %13 = sbr.rel (0) target = $region13
  $region12: #{_forward_impl.4} parent=0 // pred_region
    _
  $region13: #{_forward_impl.4} parent=0 // pred_fallthru
    _
  %v15 = vld [vmem:[%s0] sm:$0xff]
  %v16 = vld [vmem:[%s0 + $0x8] sm:$0xff]
  %v17 = vld [vmem:[%s0 + $0x10] sm:$0xff]
  %v18 = vld [vmem:[%s0 + $0x18] sm:$0xff]
  %v19 = vld [vmem:[%s0 + $0x20] sm:$0xff]
  %v20 = vld [vmem:[%s0 + $0x28] sm:$0xff]
  %v21 = vld [vmem:[%s0 + $0x30] sm:$0xff]
  %v22 = vld [vmem:[%s0 + $0x38] sm:$0xff]
  %v23 = vld [vmem:[%s0 + $0x40] sm:$0xff]
  %v24 = vld [vmem:[%s0 + $0x48] sm:$0xff]
  %v25 = vld [vmem:[%s0 + $0x50] sm:$0xff]
  %v26 = vld [vmem:[%s0 + $0x58] sm:$0xff]
  %v27 = vld [vmem:[%s0 + $0x60] sm:$0xff]
  %v28 = vld [vmem:[%s0 + $0x68] sm:$0xff]
  %v29 = vld [vmem:[%s0 + $0x70] sm:$0xff]
  %v30 = vld [vmem:[%s0 + $0x78] sm:$0xff]
  %v31 = vmul.f32 %v15, %v15
  %v32 = vmul.f32 %v16, %v16
  %v33 = vmul.f32 %v17, %v17
  %v34 = vmul.f32 %v18, %v18
  %v35 = vmul.f32 %v19, %v19
  %v36 = vmul.f32 %v20, %v20
  %v37 = vmul.f32 %v21, %v21
  %v38 = vmul.f32 %v22, %v22
  %v39 = vmul.f32 %v23, %v23
  %v40 = vmul.f32 %v24, %v24
  %v41 = vmul.f32 %v25, %v25
  %v42 = vmul.f32 %v26, %v26
  %v43 = vmul.f32 %v27, %v27
  %v44 = vmul.f32 %v28, %v28
  %v45 = vmul.f32 %v29, %v29
  %v46 = vmul.f32 %v30, %v30
  %47 = vadd.xlane.f32.xlu0 %v31
  %v48 = vpop.xlane.xlu0 %47
  %49 = vadd.xlane.f32.xlu0 %v32
  %v50 = vpop.xlane.xlu0 %49
  %51 = vadd.xlane.f32.xlu0 %v33
  %v52 = vpop.xlane.xlu0 %51
  %53 = vadd.xlane.f32.xlu0 %v34
  %v54 = vpop.xlane.xlu0 %53
  %55 = vadd.xlane.f32.xlu0 %v35
  %v56 = vpop.xlane.xlu0 %55
  %57 = vadd.xlane.f32.xlu0 %v36
  %v58 = vpop.xlane.xlu0 %57
  %59 = vadd.xlane.f32.xlu0 %v37
  %v60 = vpop.xlane.xlu0 %59
  %61 = vadd.xlane.f32.xlu0 %v38
  %v62 = vpop.xlane.xlu0 %61
  %63 = vadd.xlane.f32.xlu0 %v39
  %v64 = vpop.xlane.xlu0 %63
  %65 = vadd.xlane.f32.xlu0 %v40
  %v66 = vpop.xlane.xlu0 %65
  %67 = vadd.xlane.f32.xlu0 %v41
  %v68 = vpop.xlane.xlu0 %67
  %69 = vadd.xlane.f32.xlu0 %v42
  %v70 = vpop.xlane.xlu0 %69
  %71 = vadd.xlane.f32.xlu0 %v43
  %v72 = vpop.xlane.xlu0 %71
  %73 = vadd.xlane.f32.xlu0 %v44
  %v74 = vpop.xlane.xlu0 %73
  %75 = vadd.xlane.f32.xlu0 %v45
  %v76 = vpop.xlane.xlu0 %75
  %77 = vadd.xlane.f32.xlu0 %v46
  %v78 = vpop.xlane.xlu0 %77
  %v79 = vld [vmem:[%s1] sm:$0xff]
  %v80 = vld [vmem:[%s1 + $0x8] sm:$0xff]
  %v81 = vld [vmem:[%s1 + $0x10] sm:$0xff]
  %v82 = vld [vmem:[%s1 + $0x18] sm:$0xff]
  %v83 = vld [vmem:[%s1 + $0x20] sm:$0xff]
  %v84 = vld [vmem:[%s1 + $0x28] sm:$0xff]
  %v85 = vld [vmem:[%s1 + $0x30] sm:$0xff]
  %v86 = vld [vmem:[%s1 + $0x38] sm:$0xff]
  %v87 = vld [vmem:[%s1 + $0x40] sm:$0xff]
  %v88 = vld [vmem:[%s1 + $0x48] sm:$0xff]
  %v89 = vld [vmem:[%s1 + $0x50] sm:$0xff]
  %v90 = vld [vmem:[%s1 + $0x58] sm:$0xff]
  %v91 = vld [vmem:[%s1 + $0x60] sm:$0xff]
  %v92 = vld [vmem:[%s1 + $0x68] sm:$0xff]
  %v93 = vld [vmem:[%s1 + $0x70] sm:$0xff]
  %v94 = vld [vmem:[%s1 + $0x78] sm:$0xff]
  %v95 = vrsqrt.pop %v48
  %v96 = vmul.f32 %v48, %v95
  %vm97 = vcmp.eq.f32.partialorder %v48, inf
  %v98 = vsel %vm97, %v48, %v96
  %vm99 = vcmp.eq.f32.partialorder %v48, 0.0
  %v100 = vand.u32 %v48, 2147483648
  %v101 = vsel %vm99, %v100, %v98
  %v102 = vrsqrt.pop %v50
  %v103 = vmul.f32 %v50, %v102
  %vm104 = vcmp.eq.f32.partialorder %v50, inf
  %v105 = vsel %vm104, %v50, %v103
  %vm106 = vcmp.eq.f32.partialorder %v50, 0.0
  %v107 = vand.u32 %v50, 2147483648
  %v108 = vsel %vm106, %v107, %v105
  %v109 = vrsqrt.pop %v52
  %v110 = vmul.f32 %v52, %v109
  %vm111 = vcmp.eq.f32.partialorder %v52, inf
  %v112 = vsel %vm111, %v52, %v110
  %vm113 = vcmp.eq.f32.partialorder %v52, 0.0
  %v114 = vand.u32 %v52, 2147483648
  %v115 = vsel %vm113, %v114, %v112
  %v116 = vrsqrt.pop %v54
  %v117 = vmul.f32 %v54, %v116
  %vm118 = vcmp.eq.f32.partialorder %v54, inf
  %v119 = vsel %vm118, %v54, %v117
  %vm120 = vcmp.eq.f32.partialorder %v54, 0.0
  %v121 = vand.u32 %v54, 2147483648
  %v122 = vsel %vm120, %v121, %v119
  %v123 = vrsqrt.pop %v56
  %v124 = vmul.f32 %v56, %v123
  %vm125 = vcmp.eq.f32.partialorder %v56, inf
  %v126 = vsel %vm125, %v56, %v124
  %vm127 = vcmp.eq.f32.partialorder %v56, 0.0
  %v128 = vand.u32 %v56, 2147483648
  %v129 = vsel %vm127, %v128, %v126
  %v130 = vrsqrt.pop %v58
  %v131 = vmul.f32 %v58, %v130
  %vm132 = vcmp.eq.f32.partialorder %v58, inf
  %v133 = vsel %vm132, %v58, %v131
  %vm134 = vcmp.eq.f32.partialorder %v58, 0.0
  %v135 = vand.u32 %v58, 2147483648
  %v136 = vsel %vm134, %v135, %v133
  %v137 = vrsqrt.pop %v60
  %v138 = vmul.f32 %v60, %v137
  %vm139 = vcmp.eq.f32.partialorder %v60, inf
  %v140 = vsel %vm139, %v60, %v138
  %vm141 = vcmp.eq.f32.partialorder %v60, 0.0
  %v142 = vand.u32 %v60, 2147483648
  %v143 = vsel %vm141, %v142, %v140
  %v144 = vrsqrt.pop %v62
  %v145 = vmul.f32 %v62, %v144
  %vm146 = vcmp.eq.f32.partialorder %v62, inf
  %v147 = vsel %vm146, %v62, %v145
  %vm148 = vcmp.eq.f32.partialorder %v62, 0.0
  %v149 = vand.u32 %v62, 2147483648
  %v150 = vsel %vm148, %v149, %v147
  %v151 = vrsqrt.pop %v64
  %v152 = vmul.f32 %v64, %v151
  %vm153 = vcmp.eq.f32.partialorder %v64, inf
  %v154 = vsel %vm153, %v64, %v152
  %vm155 = vcmp.eq.f32.partialorder %v64, 0.0
  %v156 = vand.u32 %v64, 2147483648
  %v157 = vsel %vm155, %v156, %v154
  %v158 = vrsqrt.pop %v66
  %v159 = vmul.f32 %v66, %v158
  %vm160 = vcmp.eq.f32.partialorder %v66, inf
  %v161 = vsel %vm160, %v66, %v159
  %vm162 = vcmp.eq.f32.partialorder %v66, 0.0
  %v163 = vand.u32 %v66, 2147483648
  %v164 = vsel %vm162, %v163, %v161
  %v165 = vrsqrt.pop %v68
  %v166 = vmul.f32 %v68, %v165
  %vm167 = vcmp.eq.f32.partialorder %v68, inf
  %v168 = vsel %vm167, %v68, %v166
  %vm169 = vcmp.eq.f32.partialorder %v68, 0.0
  %v170 = vand.u32 %v68, 2147483648
  %v171 = vsel %vm169, %v170, %v168
  %v172 = vrsqrt.pop %v70
  %v173 = vmul.f32 %v70, %v172
  %vm174 = vcmp.eq.f32.partialorder %v70, inf
  %v175 = vsel %vm174, %v70, %v173
  %vm176 = vcmp.eq.f32.partialorder %v70, 0.0
  %v177 = vand.u32 %v70, 2147483648
  %v178 = vsel %vm176, %v177, %v175
  %v179 = vrsqrt.pop %v72
  %v180 = vmul.f32 %v72, %v179
  %vm181 = vcmp.eq.f32.partialorder %v72, inf
  %v182 = vsel %vm181, %v72, %v180
  %vm183 = vcmp.eq.f32.partialorder %v72, 0.0
  %v184 = vand.u32 %v72, 2147483648
  %v185 = vsel %vm183, %v184, %v182
  %v186 = vrsqrt.pop %v74
  %v187 = vmul.f32 %v74, %v186
  %vm188 = vcmp.eq.f32.partialorder %v74, inf
  %v189 = vsel %vm188, %v74, %v187
  %vm190 = vcmp.eq.f32.partialorder %v74, 0.0
  %v191 = vand.u32 %v74, 2147483648
  %v192 = vsel %vm190, %v191, %v189
  %v193 = vrsqrt.pop %v76
  %v194 = vmul.f32 %v76, %v193
  %vm195 = vcmp.eq.f32.partialorder %v76, inf
  %v196 = vsel %vm195, %v76, %v194
  %vm197 = vcmp.eq.f32.partialorder %v76, 0.0
  %v198 = vand.u32 %v76, 2147483648
  %v199 = vsel %vm197, %v198, %v196
  %v200 = vrsqrt.pop %v78
  %v201 = vmul.f32 %v78, %v200
  %vm202 = vcmp.eq.f32.partialorder %v78, inf
  %v203 = vsel %vm202, %v78, %v201
  %vm204 = vcmp.eq.f32.partialorder %v78, 0.0
  %v205 = vand.u32 %v78, 2147483648
  %v206 = vsel %vm204, %v205, %v203
  %v207 = vadd.f32 %v101, 0.0001
  %v208 = vadd.f32 %v108, 0.0001
  %v209 = vadd.f32 %v115, 0.0001
  %v210 = vadd.f32 %v122, 0.0001
  %v211 = vadd.f32 %v129, 0.0001
  %v212 = vadd.f32 %v136, 0.0001
  %v213 = vadd.f32 %v143, 0.0001
  %v214 = vadd.f32 %v150, 0.0001
  %v215 = vadd.f32 %v157, 0.0001
  %v216 = vadd.f32 %v164, 0.0001
  %v217 = vadd.f32 %v171, 0.0001
  %v218 = vadd.f32 %v178, 0.0001
  %v219 = vadd.f32 %v185, 0.0001
  %v220 = vadd.f32 %v192, 0.0001
  %v221 = vadd.f32 %v199, 0.0001
  %v222 = vadd.f32 %v206, 0.0001
  %v223 = vrcp.pop %v207
  %v224 = vmul.f32 %v79, %v223
  %v225 = vrcp.pop %v208
  %v226 = vmul.f32 %v80, %v225
  %v227 = vrcp.pop %v209
  %v228 = vmul.f32 %v81, %v227
  %v229 = vrcp.pop %v210
  %v230 = vmul.f32 %v82, %v229
  %v231 = vrcp.pop %v211
  %v232 = vmul.f32 %v83, %v231
  %v233 = vrcp.pop %v212
  %v234 = vmul.f32 %v84, %v233
  %v235 = vrcp.pop %v213
  %v236 = vmul.f32 %v85, %v235
  %v237 = vrcp.pop %v214
  %v238 = vmul.f32 %v86, %v237
  %v239 = vrcp.pop %v215
  %v240 = vmul.f32 %v87, %v239
  %v241 = vrcp.pop %v216
  %v242 = vmul.f32 %v88, %v241
  %v243 = vrcp.pop %v217
  %v244 = vmul.f32 %v89, %v243
  %v245 = vrcp.pop %v218
  %v246 = vmul.f32 %v90, %v245
  %v247 = vrcp.pop %v219
  %v248 = vmul.f32 %v91, %v247
  %v249 = vrcp.pop %v220
  %v250 = vmul.f32 %v92, %v249
  %v251 = vrcp.pop %v221
  %v252 = vmul.f32 %v93, %v251
  %v253 = vrcp.pop %v222
  %v254 = vmul.f32 %v94, %v253
  %256 = vset.pattern.permute.xlu0 0
  %257 = vperm.xlu0 %256, %v224
  %v258 = vpop.permute.xlu0 %257
  %261 = vset.pattern.permute.xlu0 0
  %262 = vperm.xlu0 %261, %v226
  %v263 = vpop.permute.xlu0 %262
  %266 = vset.pattern.permute.xlu0 0
  %267 = vperm.xlu0 %266, %v228
  %v268 = vpop.permute.xlu0 %267
  %271 = vset.pattern.permute.xlu0 0
  %272 = vperm.xlu0 %271, %v230
  %v273 = vpop.permute.xlu0 %272
  %276 = vset.pattern.permute.xlu0 0
  %277 = vperm.xlu0 %276, %v232
  %v278 = vpop.permute.xlu0 %277
  %281 = vset.pattern.permute.xlu0 0
  %282 = vperm.xlu0 %281, %v234
  %v283 = vpop.permute.xlu0 %282
  %286 = vset.pattern.permute.xlu0 0
  %287 = vperm.xlu0 %286, %v236
  %v288 = vpop.permute.xlu0 %287
  %291 = vset.pattern.permute.xlu0 0
  %292 = vperm.xlu0 %291, %v238
  %v293 = vpop.permute.xlu0 %292
  %296 = vset.pattern.permute.xlu0 0
  %297 = vperm.xlu0 %296, %v240
  %v298 = vpop.permute.xlu0 %297
  %301 = vset.pattern.permute.xlu0 0
  %302 = vperm.xlu0 %301, %v242
  %v303 = vpop.permute.xlu0 %302
  %306 = vset.pattern.permute.xlu0 0
  %307 = vperm.xlu0 %306, %v244
  %v308 = vpop.permute.xlu0 %307
  %311 = vset.pattern.permute.xlu0 0
  %312 = vperm.xlu0 %311, %v246
  %v313 = vpop.permute.xlu0 %312
  %316 = vset.pattern.permute.xlu0 0
  %317 = vperm.xlu0 %316, %v248
  %v318 = vpop.permute.xlu0 %317
  %321 = vset.pattern.permute.xlu0 0
  %322 = vperm.xlu0 %321, %v250
  %v323 = vpop.permute.xlu0 %322
  %326 = vset.pattern.permute.xlu0 0
  %327 = vperm.xlu0 %326, %v252
  %v328 = vpop.permute.xlu0 %327
  %331 = vset.pattern.permute.xlu0 0
  %332 = vperm.xlu0 %331, %v254
  %v333 = vpop.permute.xlu0 %332
  %v335 = vmul.f32 %v15, %v258
  %v336 = vmul.f32 %v16, %v263
  %v337 = vmul.f32 %v17, %v268
  %v338 = vmul.f32 %v18, %v273
  %v339 = vmul.f32 %v19, %v278
  %v340 = vmul.f32 %v20, %v283
  %v341 = vmul.f32 %v21, %v288
  %v342 = vmul.f32 %v22, %v293
  %v343 = vmul.f32 %v23, %v298
  %v344 = vmul.f32 %v24, %v303
  %v345 = vmul.f32 %v25, %v308
  %v346 = vmul.f32 %v26, %v313
  %v347 = vmul.f32 %v27, %v318
  %v348 = vmul.f32 %v28, %v323
  %v349 = vmul.f32 %v29, %v328
  %v350 = vmul.f32 %v30, %v333
  %v351 = vpack.c.bf16 %v336, %v335
  %v352 = vpack.c.bf16 %v338, %v337
  %v353 = vpack.c.bf16 %v340, %v339
  %v354 = vpack.c.bf16 %v342, %v341
  %v355 = vpack.c.bf16 %v344, %v343
  %v356 = vpack.c.bf16 %v346, %v345
  %v357 = vpack.c.bf16 %v348, %v347
  %v358 = vpack.c.bf16 %v350, %v349
  %v359 = vld [vmem:[%s2] sm:$0xf]
  %v360 = vld [vmem:[%s2 + $0x4] sm:$0xf]
  %v361 = vld [vmem:[%s2 + $0x8] sm:$0xf]
  %v362 = vld [vmem:[%s2 + $0xc] sm:$0xf]
  %v363 = vld [vmem:[%s2 + $0x10] sm:$0xf]
  %v364 = vld [vmem:[%s2 + $0x14] sm:$0xf]
  %v365 = vld [vmem:[%s2 + $0x18] sm:$0xf]
  %v366 = vld [vmem:[%s2 + $0x1c] sm:$0xf]
  %v367 = vld [vmem:[%s2 + $0x20] sm:$0xf]
  %v368 = vld [vmem:[%s2 + $0x24] sm:$0xf]
  %v369 = vld [vmem:[%s2 + $0x28] sm:$0xf]
  %v370 = vld [vmem:[%s2 + $0x2c] sm:$0xf]
  %v371 = vld [vmem:[%s2 + $0x30] sm:$0xf]
  %v372 = vld [vmem:[%s2 + $0x34] sm:$0xf]
  %v373 = vld [vmem:[%s2 + $0x38] sm:$0xf]
  %v374 = vld [vmem:[%s2 + $0x3c] sm:$0xf]
  %v391 = vunpack.c.l.b16 %v359
  %v392 = vunpack.c.l.b16 %v360
  %v393 = vunpack.c.l.b16 %v361
  %v394 = vunpack.c.l.b16 %v362
  %v395 = vunpack.c.l.b16 %v363
  %v396 = vunpack.c.l.b16 %v364
  %v397 = vunpack.c.l.b16 %v365
  %v398 = vunpack.c.l.b16 %v366
  %v399 = vunpack.c.l.b16 %v367
  %v400 = vunpack.c.l.b16 %v368
  %v401 = vunpack.c.l.b16 %v369
  %v402 = vunpack.c.l.b16 %v370
  %v403 = vunpack.c.l.b16 %v371
  %v404 = vunpack.c.l.b16 %v372
  %v405 = vunpack.c.l.b16 %v373
  %v406 = vunpack.c.l.b16 %v374
  %v407 = vpack.c.b16 %v392, %v391
  %v408 = vpack.c.b16 %v394, %v393
  %v409 = vpack.c.b16 %v396, %v395
  %v410 = vpack.c.b16 %v398, %v397
  %v411 = vpack.c.b16 %v400, %v399
  %v412 = vpack.c.b16 %v402, %v401
  %v413 = vpack.c.b16 %v404, %v403
  %v414 = vpack.c.b16 %v406, %v405
  %423 = vmatprep.subr.bf16.mxu0 0
  %424 = vmatpush1.bf16.msra.mxu0 %v414
  %425 = vmatprep.subr.bf16.mxu0 0
  %426 = vmatpush1.bf16.msra.mxu0 %v413
  %427 = vmatprep.subr.bf16.mxu0 0
  %428 = vmatpush1.bf16.msra.mxu0 %v412
  %429 = vmatprep.subr.bf16.mxu0 0
  %430 = vmatpush1.bf16.msra.mxu0 %v411
  %431 = vmatprep.subr.bf16.mxu0 0
  %432 = vmatpush1.bf16.msra.mxu0 %v410
  %433 = vmatprep.subr.bf16.mxu0 0
  %434 = vmatpush1.bf16.msra.mxu0 %v409
  %435 = vmatprep.subr.bf16.mxu0 0
  %436 = vmatpush1.bf16.msra.mxu0 %v408
  %437 = vmatprep.subr.bf16.mxu0 0
  %438 = vmatpush1.bf16.msra.mxu0 %v407
  %439 = vmatprep.subr.bf16.mxu0 0
  %440 = vmatpush2.bf16.msra.mxu0 0
  %441 = vmatprep.subr.bf16.mxu0 0
  %442 = vmatpush2.bf16.msra.mxu0 0
  %443 = vmatprep.subr.bf16.mxu0 0
  %444 = vmatpush2.bf16.msra.mxu0 0
  %445 = vmatprep.subr.bf16.mxu0 0
  %446 = vmatpush2.bf16.msra.mxu0 0
  %447 = vmatprep.subr.bf16.mxu0 0
  %448 = vmatpush2.bf16.msra.mxu0 0
  %449 = vmatprep.subr.bf16.mxu0 0
  %450 = vmatpush2.bf16.msra.mxu0 0
  %451 = vmatprep.subr.bf16.mxu0 0
  %452 = vmatpush2.bf16.msra.mxu0 0
  %453 = vmatprep.subr.bf16.mxu0 0
  %454 = vmatpush2.bf16.msra.mxu0 0
  %455 = vmatprep.mubr.bf16.mxu0 0
  %456 = vmatmul.mubr.bf16.gmra.mxu0 %v351
  %v457 = vpop.f32.mrf.mxu0
  %v458 = vadd.f32 0.0, %v457
  %v459 = vpop.f32.mrf.mxu0
  %v460 = vpop.f32.mrf.mxu0
  %v461 = vadd.f32 0.0, %v460
  %v462 = vpop.f32.mrf.mxu0
  %463 = vmatprep.mubr.bf16.mxu0 0
  %464 = vmatmul.mubr.bf16.gmra.mxu0 %v352
  %v465 = vpop.f32.mrf.mxu0
  %v466 = vadd.f32 0.0, %v465
  %v467 = vpop.f32.mrf.mxu0
  %v468 = vpop.f32.mrf.mxu0
  %v469 = vadd.f32 0.0, %v468
  %v470 = vpop.f32.mrf.mxu0
  %471 = vmatprep.mubr.bf16.mxu0 0
  %472 = vmatmul.mubr.bf16.gmra.mxu0 %v353
  %v473 = vpop.f32.mrf.mxu0
  %v474 = vadd.f32 0.0, %v473
  %v475 = vpop.f32.mrf.mxu0
  %v476 = vpop.f32.mrf.mxu0
  %v477 = vadd.f32 0.0, %v476
  %v478 = vpop.f32.mrf.mxu0
  %479 = vmatprep.mubr.bf16.mxu0 0
  %480 = vmatmul.mubr.bf16.gmra.mxu0 %v354
  %v481 = vpop.f32.mrf.mxu0
  %v482 = vadd.f32 0.0, %v481
  %v483 = vpop.f32.mrf.mxu0
  %v484 = vpop.f32.mrf.mxu0
  %v485 = vadd.f32 0.0, %v484
  %v486 = vpop.f32.mrf.mxu0
  %487 = vmatprep.mubr.bf16.mxu0 0
  %488 = vmatmul.mubr.bf16.gmra.mxu0 %v355
  %v489 = vpop.f32.mrf.mxu0
  %v490 = vadd.f32 0.0, %v489
  %v491 = vpop.f32.mrf.mxu0
  %v492 = vpop.f32.mrf.mxu0
  %v493 = vadd.f32 0.0, %v492
  %v494 = vpop.f32.mrf.mxu0
  %495 = vmatprep.mubr.bf16.mxu0 0
  %496 = vmatmul.mubr.bf16.gmra.mxu0 %v356
  %v497 = vpop.f32.mrf.mxu0
  %v498 = vadd.f32 0.0, %v497
  %v499 = vpop.f32.mrf.mxu0
  %v500 = vpop.f32.mrf.mxu0
  %v501 = vadd.f32 0.0, %v500
  %v502 = vpop.f32.mrf.mxu0
  %503 = vmatprep.mubr.bf16.mxu0 0
  %504 = vmatmul.mubr.bf16.gmra.mxu0 %v357
  %v505 = vpop.f32.mrf.mxu0
  %v506 = vadd.f32 0.0, %v505
  %v507 = vpop.f32.mrf.mxu0
  %v508 = vpop.f32.mrf.mxu0
  %v509 = vadd.f32 0.0, %v508
  %v510 = vpop.f32.mrf.mxu0
  %511 = vmatprep.mubr.bf16.mxu0 0
  %512 = vmatmul.mubr.bf16.gmra.mxu0 %v358
  %v513 = vpop.f32.mrf.mxu0
  %v514 = vadd.f32 0.0, %v513
  %v515 = vpop.f32.mrf.mxu0
  %v516 = vpop.f32.mrf.mxu0
  %v517 = vadd.f32 0.0, %v516
  %v518 = vpop.f32.mrf.mxu0
  %519 = vdwg.mxu0
  %v520 = vpack.c.bf16 %v461, %v458
  %v521 = vpack.c.bf16 %v469, %v466
  %v522 = vpack.c.bf16 %v477, %v474
  %v523 = vpack.c.bf16 %v485, %v482
  %v524 = vpack.c.bf16 %v493, %v490
  %v525 = vpack.c.bf16 %v501, %v498
  %v526 = vpack.c.bf16 %v509, %v506
  %v527 = vpack.c.bf16 %v517, %v514
  %v536 = vunpack.c.l.b16 %v520
  %v537 = vunpack.c.h.b16 %v520
  %v538 = vunpack.c.l.b16 %v521
  %v539 = vunpack.c.h.b16 %v521
  %v540 = vunpack.c.l.b16 %v522
  %v541 = vunpack.c.h.b16 %v522
  %v542 = vunpack.c.l.b16 %v523
  %v543 = vunpack.c.h.b16 %v523
  %v544 = vunpack.c.l.b16 %v524
  %v545 = vunpack.c.h.b16 %v524
  %v546 = vunpack.c.l.b16 %v525
  %v547 = vunpack.c.h.b16 %v525
  %v548 = vunpack.c.l.b16 %v526
  %v549 = vunpack.c.h.b16 %v526
  %v550 = vunpack.c.l.b16 %v527
  %v551 = vunpack.c.h.b16 %v527
  %v552 = vpack.c.b16 %v536, %v536
  %v553 = vpack.c.b16 %v537, %v537
  %v554 = vpack.c.b16 %v538, %v538
  %v555 = vpack.c.b16 %v539, %v539
  %v556 = vpack.c.b16 %v540, %v540
  %v557 = vpack.c.b16 %v541, %v541
  %v558 = vpack.c.b16 %v542, %v542
  %v559 = vpack.c.b16 %v543, %v543
  %v560 = vpack.c.b16 %v544, %v544
  %v561 = vpack.c.b16 %v545, %v545
  %v562 = vpack.c.b16 %v546, %v546
  %v563 = vpack.c.b16 %v547, %v547
  %v564 = vpack.c.b16 %v548, %v548
  %v565 = vpack.c.b16 %v549, %v549
  %v566 = vpack.c.b16 %v550, %v550
  %v567 = vpack.c.b16 %v551, %v551
  %584 = vst [vmem:[%s3] sm:$0xf] %v552
  %585 = vst [vmem:[%s3 + $0x4] sm:$0xf] %v553
  %586 = vst [vmem:[%s3 + $0x8] sm:$0xf] %v554
  %587 = vst [vmem:[%s3 + $0xc] sm:$0xf] %v555
  %588 = vst [vmem:[%s3 + $0x10] sm:$0xf] %v556
  %589 = vst [vmem:[%s3 + $0x14] sm:$0xf] %v557
  %590 = vst [vmem:[%s3 + $0x18] sm:$0xf] %v558
  %591 = vst [vmem:[%s3 + $0x1c] sm:$0xf] %v559
  %592 = vst [vmem:[%s3 + $0x20] sm:$0xf] %v560
  %593 = vst [vmem:[%s3 + $0x24] sm:$0xf] %v561
  %594 = vst [vmem:[%s3 + $0x28] sm:$0xf] %v562
  %595 = vst [vmem:[%s3 + $0x2c] sm:$0xf] %v563
  %596 = vst [vmem:[%s3 + $0x30] sm:$0xf] %v564
  %597 = vst [vmem:[%s3 + $0x34] sm:$0xf] %v565
  %598 = vst [vmem:[%s3 + $0x38] sm:$0xf] %v566
  %599 = vst [vmem:[%s3 + $0x3c] sm:$0xf] %v567
  // Predicated region
  $region14: #{_forward_impl.4} parent=0 // pred_check
    _
  $region15: #{_forward_impl.4} parent=0 // pred_check_branch
    %601 = sbr.rel (0) target = $region17
  $region16: #{_forward_impl.4} parent=0 // pred_region
    _
  $region17: #{_forward_impl.4} parent=0 // pred_fallthru
    _
  // Predicated region
  $region18: #{_forward_impl.4} parent=0 // pred_check
    _
  $region19: #{_forward_impl.4} parent=0 // pred_check_branch
    %603 = sbr.rel (0) target = $region21
  $region20: #{_forward_impl.4} parent=0 // pred_region
    _
  $region21: #{_forward_impl.4} parent=0 // pred_fallthru
    _

// kernel: _forward_impl.5
$region0: #{_forward_impl.5}
  #allocation0 [shape = 'u32[]', space=smem, size = 0x4, offset = 0x4, fixed_abs, tag = 'smem constant byte address 0x4 - core index']
  #allocation1 [shape = 'u32[144,128]{1,0:T(1,128)}', space=vmem, size = 0x12000, scoped, tag = 'internal scratch']
  #allocation2 [shape = 'f32[128,128]{1,0:T(8,128)}', space=vmem, size = 0x10000, scoped, tag = 'scratch operand']
  %s0 = inlined_call_operand.vmem [shape: s8[128,128], index: 0, kind: input, shape index: {}]
  %s1 = inlined_call_operand.vmem [shape: bf16[128,128], index: 1, kind: input, shape index: {}]
  %s2 = inlined_call_operand.vmem [shape: f32[128,1], index: 2, kind: input, shape index: {}]
  %s3 = inlined_call_operand.vmem [shape: f32[1,128], index: 3, kind: input, shape index: {}]
  %s4 = inlined_call_operand.vmem [shape: bf16[128,128], index: 4, kind: output, shape index: {}]
  %s5 = sld [smem:[#allocation0]]
  $region34: #{_forward_impl.5} parent=0
    _
  %s7 = ssub.s32 1, %s5
  %s8 = scalar_select 0, %s7, %s5
  // Predicated region
  $region2: #{_forward_impl.5} parent=0 // pred_check
    _
  $region3: #{_forward_impl.5} parent=0 // pred_check_branch
    %10 = sbr.rel (0) target = $region5
  $region4: #{_forward_impl.5} parent=0 // pred_region
    _
  $region5: #{_forward_impl.5} parent=0 // pred_fallthru
    _
  // Predicated region
  $region6: #{_forward_impl.5} parent=0 // pred_check
    _
  $region7: #{_forward_impl.5} parent=0 // pred_check_branch
    %12 = sbr.rel (0) target = $region9
  $region8: #{_forward_impl.5} parent=0 // pred_region
    _
  $region9: #{_forward_impl.5} parent=0 // pred_fallthru
    _
  // Predicated region
  $region10: #{_forward_impl.5} parent=0 // pred_check
    _
  $region11: #{_forward_impl.5} parent=0 // pred_check_branch
    %14 = sbr.rel (0) target = $region13
  $region12: #{_forward_impl.5} parent=0 // pred_region
    _
  $region13: #{_forward_impl.5} parent=0 // pred_fallthru
    _
  // Predicated region
  $region14: #{_forward_impl.5} parent=0 // pred_check
    _
  $region15: #{_forward_impl.5} parent=0 // pred_check_branch
    %16 = sbr.rel (0) target = $region17
  $region16: #{_forward_impl.5} parent=0 // pred_region
    _
  $region17: #{_forward_impl.5} parent=0 // pred_fallthru
    _
  %p18 = scmp.eq.s32.totalorder 0, 0
  // Predicated region
  $region18: #{_forward_impl.5} parent=0 // pred_check
    %p19 = pneg %p18
  $region19: #{_forward_impl.5} parent=0 // pred_check_branch
    %21 = sbr.rel (%p19) target = $region21
  $region20: #{_forward_impl.5} parent=0 // pred_region
    %22 = vst [vmem:[#allocation2] sm:$0xff] 0.0
    %23 = vst [vmem:[#allocation2 + $0x8] sm:$0xff] 0.0
    %24 = vst [vmem:[#allocation2 + $0x10] sm:$0xff] 0.0
    %25 = vst [vmem:[#allocation2 + $0x18] sm:$0xff] 0.0
    %26 = vst [vmem:[#allocation2 + $0x20] sm:$0xff] 0.0
    %27 = vst [vmem:[#allocation2 + $0x28] sm:$0xff] 0.0
    %28 = vst [vmem:[#allocation2 + $0x30] sm:$0xff] 0.0
    %29 = vst [vmem:[#allocation2 + $0x38] sm:$0xff] 0.0
    %30 = vst [vmem:[#allocation2 + $0x40] sm:$0xff] 0.0
    %31 = vst [vmem:[#allocation2 + $0x48] sm:$0xff] 0.0
    %32 = vst [vmem:[#allocation2 + $0x50] sm:$0xff] 0.0
    %33 = vst [vmem:[#allocation2 + $0x58] sm:$0xff] 0.0
    %34 = vst [vmem:[#allocation2 + $0x60] sm:$0xff] 0.0
    %35 = vst [vmem:[#allocation2 + $0x68] sm:$0xff] 0.0
    %36 = vst [vmem:[#allocation2 + $0x70] sm:$0xff] 0.0
    %37 = vst [vmem:[#allocation2 + $0x78] sm:$0xff] 0.0
  $region21: #{_forward_impl.5} parent=0 // pred_fallthru
    _
  %v38 = vld [vmem:[%s0] sm:$0x3]
  %v39 = vld [vmem:[%s0 + $0x2] sm:$0x3]
  %v40 = vld [vmem:[%s0 + $0x4] sm:$0x3]
  %v41 = vld [vmem:[%s0 + $0x6] sm:$0x3]
  %v42 = vld [vmem:[%s0 + $0x8] sm:$0x3]
  %v43 = vld [vmem:[%s0 + $0xa] sm:$0x3]
  %v44 = vld [vmem:[%s0 + $0xc] sm:$0x3]
  %v45 = vld [vmem:[%s0 + $0xe] sm:$0x3]
  %v46 = vld [vmem:[%s0 + $0x10] sm:$0x3]
  %v47 = vld [vmem:[%s0 + $0x12] sm:$0x3]
  %v48 = vld [vmem:[%s0 + $0x14] sm:$0x3]
  %v49 = vld [vmem:[%s0 + $0x16] sm:$0x3]
  %v50 = vld [vmem:[%s0 + $0x18] sm:$0x3]
  %v51 = vld [vmem:[%s0 + $0x1a] sm:$0x3]
  %v52 = vld [vmem:[%s0 + $0x1c] sm:$0x3]
  %v53 = vld [vmem:[%s0 + $0x1e] sm:$0x3]
  %v54 = vunpack.c.l.s8.bf16 %v38
  %v55 = vunpack.c.l.s8.bf16 %v39
  %v56 = vunpack.c.l.s8.bf16 %v40
  %v57 = vunpack.c.l.s8.bf16 %v41
  %v58 = vunpack.c.l.s8.bf16 %v42
  %v59 = vunpack.c.l.s8.bf16 %v43
  %v60 = vunpack.c.l.s8.bf16 %v44
  %v61 = vunpack.c.l.s8.bf16 %v45
  %v62 = vunpack.c.l.s8.bf16 %v46
  %v63 = vunpack.c.l.s8.bf16 %v47
  %v64 = vunpack.c.l.s8.bf16 %v48
  %v65 = vunpack.c.l.s8.bf16 %v49
  %v66 = vunpack.c.l.s8.bf16 %v50
  %v67 = vunpack.c.l.s8.bf16 %v51
  %v68 = vunpack.c.l.s8.bf16 %v52
  %v69 = vunpack.c.l.s8.bf16 %v53
  %s70 = smul.u32 0, 128
  %s71 = sshra.s32 %s70, 3
  %s72 = sand.u32 %s70, 7
  %s73 = smul.addr %s71, 4
  %s74 = scalar_lea.vmem %s1, %s73
  %v75 = vld [vmem:[%s74] sm:$0xf]
  %v76 = vld [vmem:[%s74 + $0x4] sm:$0xf]
  %v77 = vld [vmem:[%s74 + $0x8] sm:$0xf]
  %v78 = vld [vmem:[%s74 + $0xc] sm:$0xf]
  %v79 = vld [vmem:[%s74 + $0x10] sm:$0xf]
  %v80 = vld [vmem:[%s74 + $0x14] sm:$0xf]
  %v81 = vld [vmem:[%s74 + $0x18] sm:$0xf]
  %v82 = vld [vmem:[%s74 + $0x1c] sm:$0xf]
  %v83 = vld [vmem:[%s74 + $0x20] sm:$0xf]
  %v84 = vld [vmem:[%s74 + $0x24] sm:$0xf]
  %v85 = vld [vmem:[%s74 + $0x28] sm:$0xf]
  %v86 = vld [vmem:[%s74 + $0x2c] sm:$0xf]
  %v87 = vld [vmem:[%s74 + $0x30] sm:$0xf]
  %v88 = vld [vmem:[%s74 + $0x34] sm:$0xf]
  %v89 = vld [vmem:[%s74 + $0x38] sm:$0xf]
  %v90 = vld [vmem:[%s74 + $0x3c] sm:$0xf]
  %v91 = vld [vmem:[#allocation2] sm:$0xff]
  %v92 = vld [vmem:[#allocation2 + $0x8] sm:$0xff]
  %v93 = vld [vmem:[#allocation2 + $0x10] sm:$0xff]
  %v94 = vld [vmem:[#allocation2 + $0x18] sm:$0xff]
  %v95 = vld [vmem:[#allocation2 + $0x20] sm:$0xff]
  %v96 = vld [vmem:[#allocation2 + $0x28] sm:$0xff]
  %v97 = vld [vmem:[#allocation2 + $0x30] sm:$0xff]
  %v98 = vld [vmem:[#allocation2 + $0x38] sm:$0xff]
  %v99 = vld [vmem:[#allocation2 + $0x40] sm:$0xff]
  %v100 = vld [vmem:[#allocation2 + $0x48] sm:$0xff]
  %v101 = vld [vmem:[#allocation2 + $0x50] sm:$0xff]
  %v102 = vld [vmem:[#allocation2 + $0x58] sm:$0xff]
  %v103 = vld [vmem:[#allocation2 + $0x60] sm:$0xff]
  %v104 = vld [vmem:[#allocation2 + $0x68] sm:$0xff]
  %v105 = vld [vmem:[#allocation2 + $0x70] sm:$0xff]
  %v106 = vld [vmem:[#allocation2 + $0x78] sm:$0xff]
  %v123 = vunpack.c.l.b16 %v54
  %v124 = vunpack.c.l.b16 %v55
  %v125 = vunpack.c.l.b16 %v56
  %v126 = vunpack.c.l.b16 %v57
  %v127 = vunpack.c.l.b16 %v58
  %v128 = vunpack.c.l.b16 %v59
  %v129 = vunpack.c.l.b16 %v60
  %v130 = vunpack.c.l.b16 %v61
  %v131 = vunpack.c.l.b16 %v62
  %v132 = vunpack.c.l.b16 %v63
  %v133 = vunpack.c.l.b16 %v64
  %v134 = vunpack.c.l.b16 %v65
  %v135 = vunpack.c.l.b16 %v66
  %v136 = vunpack.c.l.b16 %v67
  %v137 = vunpack.c.l.b16 %v68
  %v138 = vunpack.c.l.b16 %v69
  %v139 = vpack.c.b16 %v124, %v123
  %v140 = vpack.c.b16 %v126, %v125
  %v141 = vpack.c.b16 %v128, %v127
  %v142 = vpack.c.b16 %v130, %v129
  %v143 = vpack.c.b16 %v132, %v131
  %v144 = vpack.c.b16 %v134, %v133
  %v145 = vpack.c.b16 %v136, %v135
  %v146 = vpack.c.b16 %v138, %v137
  %v171 = vunpack.c.l.b16 %v75
  %v172 = vunpack.c.l.b16 %v76
  %v173 = vunpack.c.l.b16 %v77
  %v174 = vunpack.c.l.b16 %v78
  %v175 = vunpack.c.l.b16 %v79
  %v176 = vunpack.c.l.b16 %v80
  %v177 = vunpack.c.l.b16 %v81
  %v178 = vunpack.c.l.b16 %v82
  %v179 = vunpack.c.l.b16 %v83
  %v180 = vunpack.c.l.b16 %v84
  %v181 = vunpack.c.l.b16 %v85
  %v182 = vunpack.c.l.b16 %v86
  %v183 = vunpack.c.l.b16 %v87
  %v184 = vunpack.c.l.b16 %v88
  %v185 = vunpack.c.l.b16 %v89
  %v186 = vunpack.c.l.b16 %v90
  %v187 = vpack.c.b16 %v172, %v171
  %v188 = vpack.c.b16 %v174, %v173
  %v189 = vpack.c.b16 %v176, %v175
  %v190 = vpack.c.b16 %v178, %v177
  %v191 = vpack.c.b16 %v180, %v179
  %v192 = vpack.c.b16 %v182, %v181
  %v193 = vpack.c.b16 %v184, %v183
  %v194 = vpack.c.b16 %v186, %v185
  %203 = vmatprep.subr.bf16.mxu0 0
  %204 = vmatpush1.bf16.msra.mxu0 %v194
  %205 = vmatprep.subr.bf16.mxu0 0
  %206 = vmatpush1.bf16.msra.mxu0 %v193
  %207 = vmatprep.subr.bf16.mxu0 0
  %208 = vmatpush1.bf16.msra.mxu0 %v192
  %209 = vmatprep.subr.bf16.mxu0 0
  %210 = vmatpush1.bf16.msra.mxu0 %v191
  %211 = vmatprep.subr.bf16.mxu0 0
  %212 = vmatpush1.bf16.msra.mxu0 %v190
  %213 = vmatprep.subr.bf16.mxu0 0
  %214 = vmatpush1.bf16.msra.mxu0 %v189
  %215 = vmatprep.subr.bf16.mxu0 0
  %216 = vmatpush1.bf16.msra.mxu0 %v188
  %217 = vmatprep.subr.bf16.mxu0 0
  %218 = vmatpush1.bf16.msra.mxu0 %v187
  %219 = vmatprep.subr.bf16.mxu0 0
  %220 = vmatpush2.bf16.msra.mxu0 0
  %221 = vmatprep.subr.bf16.mxu0 0
  %222 = vmatpush2.bf16.msra.mxu0 0
  %223 = vmatprep.subr.bf16.mxu0 0
  %224 = vmatpush2.bf16.msra.mxu0 0
  %225 = vmatprep.subr.bf16.mxu0 0
  %226 = vmatpush2.bf16.msra.mxu0 0
  %227 = vmatprep.subr.bf16.mxu0 0
  %228 = vmatpush2.bf16.msra.mxu0 0
  %229 = vmatprep.subr.bf16.mxu0 0
  %230 = vmatpush2.bf16.msra.mxu0 0
  %231 = vmatprep.subr.bf16.mxu0 0
  %232 = vmatpush2.bf16.msra.mxu0 0
  %233 = vmatprep.subr.bf16.mxu0 0
  %234 = vmatpush2.bf16.msra.mxu0 0
  %235 = vmatprep.mubr.bf16.mxu0 0
  %236 = vmatmul.mubr.bf16.gmra.mxu0 %v139
  %v237 = vpop.f32.mrf.mxu0
  %v238 = vadd.f32 0.0, %v237
  %v239 = vpop.f32.mrf.mxu0
  %v240 = vpop.f32.mrf.mxu0
  %v241 = vadd.f32 0.0, %v240
  %v242 = vpop.f32.mrf.mxu0
  %243 = vmatprep.mubr.bf16.mxu0 0
  %244 = vmatmul.mubr.bf16.gmra.mxu0 %v140
  %v245 = vpop.f32.mrf.mxu0
  %v246 = vadd.f32 0.0, %v245
  %v247 = vpop.f32.mrf.mxu0
  %v248 = vpop.f32.mrf.mxu0
  %v249 = vadd.f32 0.0, %v248
  %v250 = vpop.f32.mrf.mxu0
  %251 = vmatprep.mubr.bf16.mxu0 0
  %252 = vmatmul.mubr.bf16.gmra.mxu0 %v141
  %v253 = vpop.f32.mrf.mxu0
  %v254 = vadd.f32 0.0, %v253
  %v255 = vpop.f32.mrf.mxu0
  %v256 = vpop.f32.mrf.mxu0
  %v257 = vadd.f32 0.0, %v256
  %v258 = vpop.f32.mrf.mxu0
  %259 = vmatprep.mubr.bf16.mxu0 0
  %260 = vmatmul.mubr.bf16.gmra.mxu0 %v142
  %v261 = vpop.f32.mrf.mxu0
  %v262 = vadd.f32 0.0, %v261
  %v263 = vpop.f32.mrf.mxu0
  %v264 = vpop.f32.mrf.mxu0
  %v265 = vadd.f32 0.0, %v264
  %v266 = vpop.f32.mrf.mxu0
  %267 = vmatprep.mubr.bf16.mxu0 0
  %268 = vmatmul.mubr.bf16.gmra.mxu0 %v143
  %v269 = vpop.f32.mrf.mxu0
  %v270 = vadd.f32 0.0, %v269
  %v271 = vpop.f32.mrf.mxu0
  %v272 = vpop.f32.mrf.mxu0
  %v273 = vadd.f32 0.0, %v272
  %v274 = vpop.f32.mrf.mxu0
  %275 = vmatprep.mubr.bf16.mxu0 0
  %276 = vmatmul.mubr.bf16.gmra.mxu0 %v144
  %v277 = vpop.f32.mrf.mxu0
  %v278 = vadd.f32 0.0, %v277
  %v279 = vpop.f32.mrf.mxu0
  %v280 = vpop.f32.mrf.mxu0
  %v281 = vadd.f32 0.0, %v280
  %v282 = vpop.f32.mrf.mxu0
  %283 = vmatprep.mubr.bf16.mxu0 0
  %284 = vmatmul.mubr.bf16.gmra.mxu0 %v145
  %v285 = vpop.f32.mrf.mxu0
  %v286 = vadd.f32 0.0, %v285
  %v287 = vpop.f32.mrf.mxu0
  %v288 = vpop.f32.mrf.mxu0
  %v289 = vadd.f32 0.0, %v288
  %v290 = vpop.f32.mrf.mxu0
  %291 = vmatprep.mubr.bf16.mxu0 0
  %292 = vmatmul.mubr.bf16.gmra.mxu0 %v146
  %v293 = vpop.f32.mrf.mxu0
  %v294 = vadd.f32 0.0, %v293
  %v295 = vpop.f32.mrf.mxu0
  %v296 = vpop.f32.mrf.mxu0
  %v297 = vadd.f32 0.0, %v296
  %v298 = vpop.f32.mrf.mxu0
  %299 = vdwg.mxu0
  %v300 = vadd.f32 %v91, %v238
  %v301 = vadd.f32 %v92, %v241
  %v302 = vadd.f32 %v93, %v246
  %v303 = vadd.f32 %v94, %v249
  %v304 = vadd.f32 %v95, %v254
  %v305 = vadd.f32 %v96, %v257
  %v306 = vadd.f32 %v97, %v262
  %v307 = vadd.f32 %v98, %v265
  %v308 = vadd.f32 %v99, %v270
  %v309 = vadd.f32 %v100, %v273
  %v310 = vadd.f32 %v101, %v278
  %v311 = vadd.f32 %v102, %v281
  %v312 = vadd.f32 %v103, %v286
  %v313 = vadd.f32 %v104, %v289
  %v314 = vadd.f32 %v105, %v294
  %v315 = vadd.f32 %v106, %v297
  %316 = vst [vmem:[#allocation2] sm:$0xff] %v300
  %317 = vst [vmem:[#allocation2 + $0x8] sm:$0xff] %v301
  %318 = vst [vmem:[#allocation2 + $0x10] sm:$0xff] %v302
  %319 = vst [vmem:[#allocation2 + $0x18] sm:$0xff] %v303
  %320 = vst [vmem:[#allocation2 + $0x20] sm:$0xff] %v304
  %321 = vst [vmem:[#allocation2 + $0x28] sm:$0xff] %v305
  %322 = vst [vmem:[#allocation2 + $0x30] sm:$0xff] %v306
  %323 = vst [vmem:[#allocation2 + $0x38] sm:$0xff] %v307
  %324 = vst [vmem:[#allocation2 + $0x40] sm:$0xff] %v308
  %325 = vst [vmem:[#allocation2 + $0x48] sm:$0xff] %v309
  %326 = vst [vmem:[#allocation2 + $0x50] sm:$0xff] %v310
  %327 = vst [vmem:[#allocation2 + $0x58] sm:$0xff] %v311
  %328 = vst [vmem:[#allocation2 + $0x60] sm:$0xff] %v312
  %329 = vst [vmem:[#allocation2 + $0x68] sm:$0xff] %v313
  %330 = vst [vmem:[#allocation2 + $0x70] sm:$0xff] %v314
  %331 = vst [vmem:[#allocation2 + $0x78] sm:$0xff] %v315
  // Predicated region
  $region22: #{_forward_impl.5} parent=0 // pred_check
    %p332 = pneg %p18
  $region23: #{_forward_impl.5} parent=0 // pred_check_branch
    %334 = sbr.rel (%p332) target = $region25
  $region24: #{_forward_impl.5} parent=0 // pred_region
    %v335 = vld [vmem:[#allocation2] sm:$0xff]
    %v336 = vld [vmem:[#allocation2 + $0x8] sm:$0xff]
    %v337 = vld [vmem:[#allocation2 + $0x10] sm:$0xff]
    %v338 = vld [vmem:[#allocation2 + $0x18] sm:$0xff]
    %v339 = vld [vmem:[#allocation2 + $0x20] sm:$0xff]
    %v340 = vld [vmem:[#allocation2 + $0x28] sm:$0xff]
    %v341 = vld [vmem:[#allocation2 + $0x30] sm:$0xff]
    %v342 = vld [vmem:[#allocation2 + $0x38] sm:$0xff]
    %v343 = vld [vmem:[#allocation2 + $0x40] sm:$0xff]
    %v344 = vld [vmem:[#allocation2 + $0x48] sm:$0xff]
    %v345 = vld [vmem:[#allocation2 + $0x50] sm:$0xff]
    %v346 = vld [vmem:[#allocation2 + $0x58] sm:$0xff]
    %v347 = vld [vmem:[#allocation2 + $0x60] sm:$0xff]
    %v348 = vld [vmem:[#allocation2 + $0x68] sm:$0xff]
    %v349 = vld [vmem:[#allocation2 + $0x70] sm:$0xff]
    %v350 = vld [vmem:[#allocation2 + $0x78] sm:$0xff]
    %v351 = vld [vmem:[%s2] sm:$0xff]
    %v352 = vld [vmem:[%s2 + $0x8] sm:$0xff]
    %v353 = vld [vmem:[%s2 + $0x10] sm:$0xff]
    %v354 = vld [vmem:[%s2 + $0x18] sm:$0xff]
    %v355 = vld [vmem:[%s2 + $0x20] sm:$0xff]
    %v356 = vld [vmem:[%s2 + $0x28] sm:$0xff]
    %v357 = vld [vmem:[%s2 + $0x30] sm:$0xff]
    %v358 = vld [vmem:[%s2 + $0x38] sm:$0xff]
    %v359 = vld [vmem:[%s2 + $0x40] sm:$0xff]
    %v360 = vld [vmem:[%s2 + $0x48] sm:$0xff]
    %v361 = vld [vmem:[%s2 + $0x50] sm:$0xff]
    %v362 = vld [vmem:[%s2 + $0x58] sm:$0xff]
    %v363 = vld [vmem:[%s2 + $0x60] sm:$0xff]
    %v364 = vld [vmem:[%s2 + $0x68] sm:$0xff]
    %v365 = vld [vmem:[%s2 + $0x70] sm:$0xff]
    %v366 = vld [vmem:[%s2 + $0x78] sm:$0xff]
    %368 = vset.pattern.permute.xlu0 0
    %369 = vperm.xlu0 %368, %v351
    %v370 = vpop.permute.xlu0 %369
    %373 = vset.pattern.permute.xlu0 0
    %374 = vperm.xlu0 %373, %v352
    %v375 = vpop.permute.xlu0 %374
    %378 = vset.pattern.permute.xlu0 0
    %379 = vperm.xlu0 %378, %v353
    %v380 = vpop.permute.xlu0 %379
    %383 = vset.pattern.permute.xlu0 0
    %384 = vperm.xlu0 %383, %v354
    %v385 = vpop.permute.xlu0 %384
    %388 = vset.pattern.permute.xlu0 0
    %389 = vperm.xlu0 %388, %v355
    %v390 = vpop.permute.xlu0 %389
    %393 = vset.pattern.permute.xlu0 0
    %394 = vperm.xlu0 %393, %v356
    %v395 = vpop.permute.xlu0 %394
    %398 = vset.pattern.permute.xlu0 0
    %399 = vperm.xlu0 %398, %v357
    %v400 = vpop.permute.xlu0 %399
    %403 = vset.pattern.permute.xlu0 0
    %404 = vperm.xlu0 %403, %v358
    %v405 = vpop.permute.xlu0 %404
    %408 = vset.pattern.permute.xlu0 0
    %409 = vperm.xlu0 %408, %v359
    %v410 = vpop.permute.xlu0 %409
    %413 = vset.pattern.permute.xlu0 0
    %414 = vperm.xlu0 %413, %v360
    %v415 = vpop.permute.xlu0 %414
    %418 = vset.pattern.permute.xlu0 0
    %419 = vperm.xlu0 %418, %v361
    %v420 = vpop.permute.xlu0 %419
    %423 = vset.pattern.permute.xlu0 0
    %424 = vperm.xlu0 %423, %v362
    %v425 = vpop.permute.xlu0 %424
    %428 = vset.pattern.permute.xlu0 0
    %429 = vperm.xlu0 %428, %v363
    %v430 = vpop.permute.xlu0 %429
    %433 = vset.pattern.permute.xlu0 0
    %434 = vperm.xlu0 %433, %v364
    %v435 = vpop.permute.xlu0 %434
    %438 = vset.pattern.permute.xlu0 0
    %439 = vperm.xlu0 %438, %v365
    %v440 = vpop.permute.xlu0 %439
    %443 = vset.pattern.permute.xlu0 0
    %444 = vperm.xlu0 %443, %v366
    %v445 = vpop.permute.xlu0 %444
    %v447 = vmul.f32 %v335, %v370
    %v448 = vmul.f32 %v336, %v375
    %v449 = vmul.f32 %v337, %v380
    %v450 = vmul.f32 %v338, %v385
    %v451 = vmul.f32 %v339, %v390
    %v452 = vmul.f32 %v340, %v395
    %v453 = vmul.f32 %v341, %v400
    %v454 = vmul.f32 %v342, %v405
    %v455 = vmul.f32 %v343, %v410
    %v456 = vmul.f32 %v344, %v415
    %v457 = vmul.f32 %v345, %v420
    %v458 = vmul.f32 %v346, %v425
    %v459 = vmul.f32 %v347, %v430
    %v460 = vmul.f32 %v348, %v435
    %v461 = vmul.f32 %v349, %v440
    %v462 = vmul.f32 %v350, %v445
    %v463 = vld [vmem:[%s3] sm:$0x1]
    %v465 = vlaneseq
    %v466 = vshrl.u32 %v465, 7
    %v467 = vsub.s32 0, %v466
    %v468 = vrot.slane %v463, %v467
    %v470 = vadd.f32 %v447, %v468
    %v471 = vadd.f32 %v448, %v468
    %v472 = vadd.f32 %v449, %v468
    %v473 = vadd.f32 %v450, %v468
    %v474 = vadd.f32 %v451, %v468
    %v475 = vadd.f32 %v452, %v468
    %v476 = vadd.f32 %v453, %v468
    %v477 = vadd.f32 %v454, %v468
    %v478 = vadd.f32 %v455, %v468
    %v479 = vadd.f32 %v456, %v468
    %v480 = vadd.f32 %v457, %v468
    %v481 = vadd.f32 %v458, %v468
    %v482 = vadd.f32 %v459, %v468
    %v483 = vadd.f32 %v460, %v468
    %v484 = vadd.f32 %v461, %v468
    %v485 = vadd.f32 %v462, %v468
    %v486 = vpack.c.bf16 %v471, %v470
    %v487 = vpack.c.bf16 %v473, %v472
    %v488 = vpack.c.bf16 %v475, %v474
    %v489 = vpack.c.bf16 %v477, %v476
    %v490 = vpack.c.bf16 %v479, %v478
    %v491 = vpack.c.bf16 %v481, %v480
    %v492 = vpack.c.bf16 %v483, %v482
    %v493 = vpack.c.bf16 %v485, %v484
    %v502 = vunpack.c.l.b16 %v486
    %v503 = vunpack.c.h.b16 %v486
    %v504 = vunpack.c.l.b16 %v487
    %v505 = vunpack.c.h.b16 %v487
    %v506 = vunpack.c.l.b16 %v488
    %v507 = vunpack.c.h.b16 %v488
    %v508 = vunpack.c.l.b16 %v489
    %v509 = vunpack.c.h.b16 %v489
    %v510 = vunpack.c.l.b16 %v490
    %v511 = vunpack.c.h.b16 %v490
    %v512 = vunpack.c.l.b16 %v491
    %v513 = vunpack.c.h.b16 %v491
    %v514 = vunpack.c.l.b16 %v492
    %v515 = vunpack.c.h.b16 %v492
    %v516 = vunpack.c.l.b16 %v493
    %v517 = vunpack.c.h.b16 %v493
    %v518 = vpack.c.b16 %v502, %v502
    %v519 = vpack.c.b16 %v503, %v503
    %v520 = vpack.c.b16 %v504, %v504
    %v521 = vpack.c.b16 %v505, %v505
    %v522 = vpack.c.b16 %v506, %v506
    %v523 = vpack.c.b16 %v507, %v507
    %v524 = vpack.c.b16 %v508, %v508
    %v525 = vpack.c.b16 %v509, %v509
    %v526 = vpack.c.b16 %v510, %v510
    %v527 = vpack.c.b16 %v511, %v511
    %v528 = vpack.c.b16 %v512, %v512
    %v529 = vpack.c.b16 %v513, %v513
    %v530 = vpack.c.b16 %v514, %v514
    %v531 = vpack.c.b16 %v515, %v515
    %v532 = vpack.c.b16 %v516, %v516
    %v533 = vpack.c.b16 %v517, %v517
    %550 = vst [vmem:[%s4] sm:$0xf] %v518
    %551 = vst [vmem:[%s4 + $0x4] sm:$0xf] %v519
    %552 = vst [vmem:[%s4 + $0x8] sm:$0xf] %v520
    %553 = vst [vmem:[%s4 + $0xc] sm:$0xf] %v521
    %554 = vst [vmem:[%s4 + $0x10] sm:$0xf] %v522
    %555 = vst [vmem:[%s4 + $0x14] sm:$0xf] %v523
    %556 = vst [vmem:[%s4 + $0x18] sm:$0xf] %v524
    %557 = vst [vmem:[%s4 + $0x1c] sm:$0xf] %v525
    %558 = vst [vmem:[%s4 + $0x20] sm:$0xf] %v526
    %559 = vst [vmem:[%s4 + $0x24] sm:$0xf] %v527
    %560 = vst [vmem:[%s4 + $0x28] sm:$0xf] %v528
    %561 = vst [vmem:[%s4 + $0x2c] sm:$0xf] %v529
    %562 = vst [vmem:[%s4 + $0x30] sm:$0xf] %v530
    %563 = vst [vmem:[%s4 + $0x34] sm:$0xf] %v531
    %564 = vst [vmem:[%s4 + $0x38] sm:$0xf] %v532
    %565 = vst [vmem:[%s4 + $0x3c] sm:$0xf] %v533
  $region25: #{_forward_impl.5} parent=0 // pred_fallthru
    _
  // Predicated region
  $region26: #{_forward_impl.5} parent=0 // pred_check
    _
  $region27: #{_forward_impl.5} parent=0 // pred_check_branch
    %567 = sbr.rel (0) target = $region29
  $region28: #{_forward_impl.5} parent=0 // pred_region
    _
  $region29: #{_forward_impl.5} parent=0 // pred_fallthru
    _
  // Predicated region
  $region30: #{_forward_impl.5} parent=0 // pred_check
    _
  $region31: #{_forward_impl.5} parent=0 // pred_check_branch
    %569 = sbr.rel (0) target = $region33
  $region32: #{_forward_impl.5} parent=0 // pred_region
    _
  $region33: #{_forward_impl.5} parent=0 // pred_fallthru
    _

// kernel: _forward_impl.6
$region0: #{_forward_impl.6}
  #allocation0 [shape = 'u32[]', space=smem, size = 0x4, offset = 0x4, fixed_abs, tag = 'smem constant byte address 0x4 - core index']
  #allocation1 [shape = 'u32[144,128]{1,0:T(1,128)}', space=vmem, size = 0x12000, scoped, tag = 'internal scratch']
  %s0 = inlined_call_operand.vmem [shape: bf16[128,128], index: 0, kind: input, shape index: {}]
  %s1 = inlined_call_operand.vmem [shape: f32[128,1], index: 1, kind: input, shape index: {}]
  %s2 = inlined_call_operand.vmem [shape: bf16[128,128], index: 2, kind: input, shape index: {}]
  %s3 = inlined_call_operand.vmem [shape: bf16[128,128], index: 3, kind: output, shape index: {}]
  %s4 = sld [smem:[#allocation0]]
  $region22: #{_forward_impl.6} parent=0
    _
  %s6 = ssub.s32 1, %s4
  %s7 = scalar_select 0, %s6, %s4
  // Predicated region
  $region2: #{_forward_impl.6} parent=0 // pred_check
    _
  $region3: #{_forward_impl.6} parent=0 // pred_check_branch
    %9 = sbr.rel (0) target = $region5
  $region4: #{_forward_impl.6} parent=0 // pred_region
    _
  $region5: #{_forward_impl.6} parent=0 // pred_fallthru
    _
  // Predicated region
  $region6: #{_forward_impl.6} parent=0 // pred_check
    _
  $region7: #{_forward_impl.6} parent=0 // pred_check_branch
    %11 = sbr.rel (0) target = $region9
  $region8: #{_forward_impl.6} parent=0 // pred_region
    _
  $region9: #{_forward_impl.6} parent=0 // pred_fallthru
    _
  // Predicated region
  $region10: #{_forward_impl.6} parent=0 // pred_check
    _
  $region11: #{_forward_impl.6} parent=0 // pred_check_branch
    %13 = sbr.rel (0) target = $region13
  $region12: #{_forward_impl.6} parent=0 // pred_region
    _
  $region13: #{_forward_impl.6} parent=0 // pred_fallthru
    _
  %v15 = vld [vmem:[%s0] sm:$0xf]
  %v16 = vld [vmem:[%s0 + $0x4] sm:$0xf]
  %v17 = vld [vmem:[%s0 + $0x8] sm:$0xf]
  %v18 = vld [vmem:[%s0 + $0xc] sm:$0xf]
  %v19 = vld [vmem:[%s0 + $0x10] sm:$0xf]
  %v20 = vld [vmem:[%s0 + $0x14] sm:$0xf]
  %v21 = vld [vmem:[%s0 + $0x18] sm:$0xf]
  %v22 = vld [vmem:[%s0 + $0x1c] sm:$0xf]
  %v23 = vld [vmem:[%s0 + $0x20] sm:$0xf]
  %v24 = vld [vmem:[%s0 + $0x24] sm:$0xf]
  %v25 = vld [vmem:[%s0 + $0x28] sm:$0xf]
  %v26 = vld [vmem:[%s0 + $0x2c] sm:$0xf]
  %v27 = vld [vmem:[%s0 + $0x30] sm:$0xf]
  %v28 = vld [vmem:[%s0 + $0x34] sm:$0xf]
  %v29 = vld [vmem:[%s0 + $0x38] sm:$0xf]
  %v30 = vld [vmem:[%s0 + $0x3c] sm:$0xf]
  %v31 = vunpack.c.l.bf16 %v15
  %v32 = vunpack.c.l.bf16 %v16
  %v33 = vunpack.c.l.bf16 %v17
  %v34 = vunpack.c.l.bf16 %v18
  %v35 = vunpack.c.l.bf16 %v19
  %v36 = vunpack.c.l.bf16 %v20
  %v37 = vunpack.c.l.bf16 %v21
  %v38 = vunpack.c.l.bf16 %v22
  %v39 = vunpack.c.l.bf16 %v23
  %v40 = vunpack.c.l.bf16 %v24
  %v41 = vunpack.c.l.bf16 %v25
  %v42 = vunpack.c.l.bf16 %v26
  %v43 = vunpack.c.l.bf16 %v27
  %v44 = vunpack.c.l.bf16 %v28
  %v45 = vunpack.c.l.bf16 %v29
  %v46 = vunpack.c.l.bf16 %v30
  %v47 = vmul.f32 %v31, %v31
  %v48 = vmul.f32 %v32, %v32
  %v49 = vmul.f32 %v33, %v33
  %v50 = vmul.f32 %v34, %v34
  %v51 = vmul.f32 %v35, %v35
  %v52 = vmul.f32 %v36, %v36
  %v53 = vmul.f32 %v37, %v37
  %v54 = vmul.f32 %v38, %v38
  %v55 = vmul.f32 %v39, %v39
  %v56 = vmul.f32 %v40, %v40
  %v57 = vmul.f32 %v41, %v41
  %v58 = vmul.f32 %v42, %v42
  %v59 = vmul.f32 %v43, %v43
  %v60 = vmul.f32 %v44, %v44
  %v61 = vmul.f32 %v45, %v45
  %v62 = vmul.f32 %v46, %v46
  %63 = vadd.xlane.f32.xlu0 %v47
  %v64 = vpop.xlane.xlu0 %63
  %65 = vadd.xlane.f32.xlu0 %v48
  %v66 = vpop.xlane.xlu0 %65
  %67 = vadd.xlane.f32.xlu0 %v49
  %v68 = vpop.xlane.xlu0 %67
  %69 = vadd.xlane.f32.xlu0 %v50
  %v70 = vpop.xlane.xlu0 %69
  %71 = vadd.xlane.f32.xlu0 %v51
  %v72 = vpop.xlane.xlu0 %71
  %73 = vadd.xlane.f32.xlu0 %v52
  %v74 = vpop.xlane.xlu0 %73
  %75 = vadd.xlane.f32.xlu0 %v53
  %v76 = vpop.xlane.xlu0 %75
  %77 = vadd.xlane.f32.xlu0 %v54
  %v78 = vpop.xlane.xlu0 %77
  %79 = vadd.xlane.f32.xlu0 %v55
  %v80 = vpop.xlane.xlu0 %79
  %81 = vadd.xlane.f32.xlu0 %v56
  %v82 = vpop.xlane.xlu0 %81
  %83 = vadd.xlane.f32.xlu0 %v57
  %v84 = vpop.xlane.xlu0 %83
  %85 = vadd.xlane.f32.xlu0 %v58
  %v86 = vpop.xlane.xlu0 %85
  %87 = vadd.xlane.f32.xlu0 %v59
  %v88 = vpop.xlane.xlu0 %87
  %89 = vadd.xlane.f32.xlu0 %v60
  %v90 = vpop.xlane.xlu0 %89
  %91 = vadd.xlane.f32.xlu0 %v61
  %v92 = vpop.xlane.xlu0 %91
  %93 = vadd.xlane.f32.xlu0 %v62
  %v94 = vpop.xlane.xlu0 %93
  %v95 = vld [vmem:[%s1] sm:$0xff]
  %v96 = vld [vmem:[%s1 + $0x8] sm:$0xff]
  %v97 = vld [vmem:[%s1 + $0x10] sm:$0xff]
  %v98 = vld [vmem:[%s1 + $0x18] sm:$0xff]
  %v99 = vld [vmem:[%s1 + $0x20] sm:$0xff]
  %v100 = vld [vmem:[%s1 + $0x28] sm:$0xff]
  %v101 = vld [vmem:[%s1 + $0x30] sm:$0xff]
  %v102 = vld [vmem:[%s1 + $0x38] sm:$0xff]
  %v103 = vld [vmem:[%s1 + $0x40] sm:$0xff]
  %v104 = vld [vmem:[%s1 + $0x48] sm:$0xff]
  %v105 = vld [vmem:[%s1 + $0x50] sm:$0xff]
  %v106 = vld [vmem:[%s1 + $0x58] sm:$0xff]
  %v107 = vld [vmem:[%s1 + $0x60] sm:$0xff]
  %v108 = vld [vmem:[%s1 + $0x68] sm:$0xff]
  %v109 = vld [vmem:[%s1 + $0x70] sm:$0xff]
  %v110 = vld [vmem:[%s1 + $0x78] sm:$0xff]
  %v111 = vrsqrt.pop %v64
  %v112 = vmul.f32 %v64, %v111
  %vm113 = vcmp.eq.f32.partialorder %v64, inf
  %v114 = vsel %vm113, %v64, %v112
  %vm115 = vcmp.eq.f32.partialorder %v64, 0.0
  %v116 = vand.u32 %v64, 2147483648
  %v117 = vsel %vm115, %v116, %v114
  %v118 = vrsqrt.pop %v66
  %v119 = vmul.f32 %v66, %v118
  %vm120 = vcmp.eq.f32.partialorder %v66, inf
  %v121 = vsel %vm120, %v66, %v119
  %vm122 = vcmp.eq.f32.partialorder %v66, 0.0
  %v123 = vand.u32 %v66, 2147483648
  %v124 = vsel %vm122, %v123, %v121
  %v125 = vrsqrt.pop %v68
  %v126 = vmul.f32 %v68, %v125
  %vm127 = vcmp.eq.f32.partialorder %v68, inf
  %v128 = vsel %vm127, %v68, %v126
  %vm129 = vcmp.eq.f32.partialorder %v68, 0.0
  %v130 = vand.u32 %v68, 2147483648
  %v131 = vsel %vm129, %v130, %v128
  %v132 = vrsqrt.pop %v70
  %v133 = vmul.f32 %v70, %v132
  %vm134 = vcmp.eq.f32.partialorder %v70, inf
  %v135 = vsel %vm134, %v70, %v133
  %vm136 = vcmp.eq.f32.partialorder %v70, 0.0
  %v137 = vand.u32 %v70, 2147483648
  %v138 = vsel %vm136, %v137, %v135
  %v139 = vrsqrt.pop %v72
  %v140 = vmul.f32 %v72, %v139
  %vm141 = vcmp.eq.f32.partialorder %v72, inf
  %v142 = vsel %vm141, %v72, %v140
  %vm143 = vcmp.eq.f32.partialorder %v72, 0.0
  %v144 = vand.u32 %v72, 2147483648
  %v145 = vsel %vm143, %v144, %v142
  %v146 = vrsqrt.pop %v74
  %v147 = vmul.f32 %v74, %v146
  %vm148 = vcmp.eq.f32.partialorder %v74, inf
  %v149 = vsel %vm148, %v74, %v147
  %vm150 = vcmp.eq.f32.partialorder %v74, 0.0
  %v151 = vand.u32 %v74, 2147483648
  %v152 = vsel %vm150, %v151, %v149
  %v153 = vrsqrt.pop %v76
  %v154 = vmul.f32 %v76, %v153
  %vm155 = vcmp.eq.f32.partialorder %v76, inf
  %v156 = vsel %vm155, %v76, %v154
  %vm157 = vcmp.eq.f32.partialorder %v76, 0.0
  %v158 = vand.u32 %v76, 2147483648
  %v159 = vsel %vm157, %v158, %v156
  %v160 = vrsqrt.pop %v78
  %v161 = vmul.f32 %v78, %v160
  %vm162 = vcmp.eq.f32.partialorder %v78, inf
  %v163 = vsel %vm162, %v78, %v161
  %vm164 = vcmp.eq.f32.partialorder %v78, 0.0
  %v165 = vand.u32 %v78, 2147483648
  %v166 = vsel %vm164, %v165, %v163
  %v167 = vrsqrt.pop %v80
  %v168 = vmul.f32 %v80, %v167
  %vm169 = vcmp.eq.f32.partialorder %v80, inf
  %v170 = vsel %vm169, %v80, %v168
  %vm171 = vcmp.eq.f32.partialorder %v80, 0.0
  %v172 = vand.u32 %v80, 2147483648
  %v173 = vsel %vm171, %v172, %v170
  %v174 = vrsqrt.pop %v82
  %v175 = vmul.f32 %v82, %v174
  %vm176 = vcmp.eq.f32.partialorder %v82, inf
  %v177 = vsel %vm176, %v82, %v175
  %vm178 = vcmp.eq.f32.partialorder %v82, 0.0
  %v179 = vand.u32 %v82, 2147483648
  %v180 = vsel %vm178, %v179, %v177
  %v181 = vrsqrt.pop %v84
  %v182 = vmul.f32 %v84, %v181
  %vm183 = vcmp.eq.f32.partialorder %v84, inf
  %v184 = vsel %vm183, %v84, %v182
  %vm185 = vcmp.eq.f32.partialorder %v84, 0.0
  %v186 = vand.u32 %v84, 2147483648
  %v187 = vsel %vm185, %v186, %v184
  %v188 = vrsqrt.pop %v86
  %v189 = vmul.f32 %v86, %v188
  %vm190 = vcmp.eq.f32.partialorder %v86, inf
  %v191 = vsel %vm190, %v86, %v189
  %vm192 = vcmp.eq.f32.partialorder %v86, 0.0
  %v193 = vand.u32 %v86, 2147483648
  %v194 = vsel %vm192, %v193, %v191
  %v195 = vrsqrt.pop %v88
  %v196 = vmul.f32 %v88, %v195
  %vm197 = vcmp.eq.f32.partialorder %v88, inf
  %v198 = vsel %vm197, %v88, %v196
  %vm199 = vcmp.eq.f32.partialorder %v88, 0.0
  %v200 = vand.u32 %v88, 2147483648
  %v201 = vsel %vm199, %v200, %v198
  %v202 = vrsqrt.pop %v90
  %v203 = vmul.f32 %v90, %v202
  %vm204 = vcmp.eq.f32.partialorder %v90, inf
  %v205 = vsel %vm204, %v90, %v203
  %vm206 = vcmp.eq.f32.partialorder %v90, 0.0
  %v207 = vand.u32 %v90, 2147483648
  %v208 = vsel %vm206, %v207, %v205
  %v209 = vrsqrt.pop %v92
  %v210 = vmul.f32 %v92, %v209
  %vm211 = vcmp.eq.f32.partialorder %v92, inf
  %v212 = vsel %vm211, %v92, %v210
  %vm213 = vcmp.eq.f32.partialorder %v92, 0.0
  %v214 = vand.u32 %v92, 2147483648
  %v215 = vsel %vm213, %v214, %v212
  %v216 = vrsqrt.pop %v94
  %v217 = vmul.f32 %v94, %v216
  %vm218 = vcmp.eq.f32.partialorder %v94, inf
  %v219 = vsel %vm218, %v94, %v217
  %vm220 = vcmp.eq.f32.partialorder %v94, 0.0
  %v221 = vand.u32 %v94, 2147483648
  %v222 = vsel %vm220, %v221, %v219
  %v223 = vadd.f32 %v117, 0.0001
  %v224 = vadd.f32 %v124, 0.0001
  %v225 = vadd.f32 %v131, 0.0001
  %v226 = vadd.f32 %v138, 0.0001
  %v227 = vadd.f32 %v145, 0.0001
  %v228 = vadd.f32 %v152, 0.0001
  %v229 = vadd.f32 %v159, 0.0001
  %v230 = vadd.f32 %v166, 0.0001
  %v231 = vadd.f32 %v173, 0.0001
  %v232 = vadd.f32 %v180, 0.0001
  %v233 = vadd.f32 %v187, 0.0001
  %v234 = vadd.f32 %v194, 0.0001
  %v235 = vadd.f32 %v201, 0.0001
  %v236 = vadd.f32 %v208, 0.0001
  %v237 = vadd.f32 %v215, 0.0001
  %v238 = vadd.f32 %v222, 0.0001
  %v239 = vrcp.pop %v223
  %v240 = vmul.f32 %v95, %v239
  %v241 = vrcp.pop %v224
  %v242 = vmul.f32 %v96, %v241
  %v243 = vrcp.pop %v225
  %v244 = vmul.f32 %v97, %v243
  %v245 = vrcp.pop %v226
  %v246 = vmul.f32 %v98, %v245
  %v247 = vrcp.pop %v227
  %v248 = vmul.f32 %v99, %v247
  %v249 = vrcp.pop %v228
  %v250 = vmul.f32 %v100, %v249
  %v251 = vrcp.pop %v229
  %v252 = vmul.f32 %v101, %v251
  %v253 = vrcp.pop %v230
  %v254 = vmul.f32 %v102, %v253
  %v255 = vrcp.pop %v231
  %v256 = vmul.f32 %v103, %v255
  %v257 = vrcp.pop %v232
  %v258 = vmul.f32 %v104, %v257
  %v259 = vrcp.pop %v233
  %v260 = vmul.f32 %v105, %v259
  %v261 = vrcp.pop %v234
  %v262 = vmul.f32 %v106, %v261
  %v263 = vrcp.pop %v235
  %v264 = vmul.f32 %v107, %v263
  %v265 = vrcp.pop %v236
  %v266 = vmul.f32 %v108, %v265
  %v267 = vrcp.pop %v237
  %v268 = vmul.f32 %v109, %v267
  %v269 = vrcp.pop %v238
  %v270 = vmul.f32 %v110, %v269
  %272 = vset.pattern.permute.xlu0 0
  %273 = vperm.xlu0 %272, %v240
  %v274 = vpop.permute.xlu0 %273
  %277 = vset.pattern.permute.xlu0 0
  %278 = vperm.xlu0 %277, %v242
  %v279 = vpop.permute.xlu0 %278
  %282 = vset.pattern.permute.xlu0 0
  %283 = vperm.xlu0 %282, %v244
  %v284 = vpop.permute.xlu0 %283
  %287 = vset.pattern.permute.xlu0 0
  %288 = vperm.xlu0 %287, %v246
  %v289 = vpop.permute.xlu0 %288
  %292 = vset.pattern.permute.xlu0 0
  %293 = vperm.xlu0 %292, %v248
  %v294 = vpop.permute.xlu0 %293
  %297 = vset.pattern.permute.xlu0 0
  %298 = vperm.xlu0 %297, %v250
  %v299 = vpop.permute.xlu0 %298
  %302 = vset.pattern.permute.xlu0 0
  %303 = vperm.xlu0 %302, %v252
  %v304 = vpop.permute.xlu0 %303
  %307 = vset.pattern.permute.xlu0 0
  %308 = vperm.xlu0 %307, %v254
  %v309 = vpop.permute.xlu0 %308
  %312 = vset.pattern.permute.xlu0 0
  %313 = vperm.xlu0 %312, %v256
  %v314 = vpop.permute.xlu0 %313
  %317 = vset.pattern.permute.xlu0 0
  %318 = vperm.xlu0 %317, %v258
  %v319 = vpop.permute.xlu0 %318
  %322 = vset.pattern.permute.xlu0 0
  %323 = vperm.xlu0 %322, %v260
  %v324 = vpop.permute.xlu0 %323
  %327 = vset.pattern.permute.xlu0 0
  %328 = vperm.xlu0 %327, %v262
  %v329 = vpop.permute.xlu0 %328
  %332 = vset.pattern.permute.xlu0 0
  %333 = vperm.xlu0 %332, %v264
  %v334 = vpop.permute.xlu0 %333
  %337 = vset.pattern.permute.xlu0 0
  %338 = vperm.xlu0 %337, %v266
  %v339 = vpop.permute.xlu0 %338
  %342 = vset.pattern.permute.xlu0 0
  %343 = vperm.xlu0 %342, %v268
  %v344 = vpop.permute.xlu0 %343
  %347 = vset.pattern.permute.xlu0 0
  %348 = vperm.xlu0 %347, %v270
  %v349 = vpop.permute.xlu0 %348
  %v351 = vmul.f32 %v31, %v274
  %v352 = vmul.f32 %v32, %v279
  %v353 = vmul.f32 %v33, %v284
  %v354 = vmul.f32 %v34, %v289
  %v355 = vmul.f32 %v35, %v294
  %v356 = vmul.f32 %v36, %v299
  %v357 = vmul.f32 %v37, %v304
  %v358 = vmul.f32 %v38, %v309
  %v359 = vmul.f32 %v39, %v314
  %v360 = vmul.f32 %v40, %v319
  %v361 = vmul.f32 %v41, %v324
  %v362 = vmul.f32 %v42, %v329
  %v363 = vmul.f32 %v43, %v334
  %v364 = vmul.f32 %v44, %v339
  %v365 = vmul.f32 %v45, %v344
  %v366 = vmul.f32 %v46, %v349
  %v367 = vpack.c.bf16 %v352, %v351
  %v368 = vpack.c.bf16 %v354, %v353
  %v369 = vpack.c.bf16 %v356, %v355
  %v370 = vpack.c.bf16 %v358, %v357
  %v371 = vpack.c.bf16 %v360, %v359
  %v372 = vpack.c.bf16 %v362, %v361
  %v373 = vpack.c.bf16 %v364, %v363
  %v374 = vpack.c.bf16 %v366, %v365
  %v375 = vld [vmem:[%s2] sm:$0xf]
  %v376 = vld [vmem:[%s2 + $0x4] sm:$0xf]
  %v377 = vld [vmem:[%s2 + $0x8] sm:$0xf]
  %v378 = vld [vmem:[%s2 + $0xc] sm:$0xf]
  %v379 = vld [vmem:[%s2 + $0x10] sm:$0xf]
  %v380 = vld [vmem:[%s2 + $0x14] sm:$0xf]
  %v381 = vld [vmem:[%s2 + $0x18] sm:$0xf]
  %v382 = vld [vmem:[%s2 + $0x1c] sm:$0xf]
  %v383 = vld [vmem:[%s2 + $0x20] sm:$0xf]
  %v384 = vld [vmem:[%s2 + $0x24] sm:$0xf]
  %v385 = vld [vmem:[%s2 + $0x28] sm:$0xf]
  %v386 = vld [vmem:[%s2 + $0x2c] sm:$0xf]
  %v387 = vld [vmem:[%s2 + $0x30] sm:$0xf]
  %v388 = vld [vmem:[%s2 + $0x34] sm:$0xf]
  %v389 = vld [vmem:[%s2 + $0x38] sm:$0xf]
  %v390 = vld [vmem:[%s2 + $0x3c] sm:$0xf]
  %v407 = vunpack.c.l.b16 %v375
  %v408 = vunpack.c.l.b16 %v376
  %v409 = vunpack.c.l.b16 %v377
  %v410 = vunpack.c.l.b16 %v378
  %v411 = vunpack.c.l.b16 %v379
  %v412 = vunpack.c.l.b16 %v380
  %v413 = vunpack.c.l.b16 %v381
  %v414 = vunpack.c.l.b16 %v382
  %v415 = vunpack.c.l.b16 %v383
  %v416 = vunpack.c.l.b16 %v384
  %v417 = vunpack.c.l.b16 %v385
  %v418 = vunpack.c.l.b16 %v386
  %v419 = vunpack.c.l.b16 %v387
  %v420 = vunpack.c.l.b16 %v388
  %v421 = vunpack.c.l.b16 %v389
  %v422 = vunpack.c.l.b16 %v390
  %v423 = vpack.c.b16 %v408, %v407
  %v424 = vpack.c.b16 %v410, %v409
  %v425 = vpack.c.b16 %v412, %v411
  %v426 = vpack.c.b16 %v414, %v413
  %v427 = vpack.c.b16 %v416, %v415
  %v428 = vpack.c.b16 %v418, %v417
  %v429 = vpack.c.b16 %v420, %v419
  %v430 = vpack.c.b16 %v422, %v421
  %439 = vmatprep.subr.bf16.mxu0 0
  %440 = vmatpush1.bf16.msra.mxu0 %v430
  %441 = vmatprep.subr.bf16.mxu0 0
  %442 = vmatpush1.bf16.msra.mxu0 %v429
  %443 = vmatprep.subr.bf16.mxu0 0
  %444 = vmatpush1.bf16.msra.mxu0 %v428
  %445 = vmatprep.subr.bf16.mxu0 0
  %446 = vmatpush1.bf16.msra.mxu0 %v427
  %447 = vmatprep.subr.bf16.mxu0 0
  %448 = vmatpush1.bf16.msra.mxu0 %v426
  %449 = vmatprep.subr.bf16.mxu0 0
  %450 = vmatpush1.bf16.msra.mxu0 %v425
  %451 = vmatprep.subr.bf16.mxu0 0
  %452 = vmatpush1.bf16.msra.mxu0 %v424
  %453 = vmatprep.subr.bf16.mxu0 0
  %454 = vmatpush1.bf16.msra.mxu0 %v423
  %455 = vmatprep.subr.bf16.mxu0 0
  %456 = vmatpush2.bf16.msra.mxu0 0
  %457 = vmatprep.subr.bf16.mxu0 0
  %458 = vmatpush2.bf16.msra.mxu0 0
  %459 = vmatprep.subr.bf16.mxu0 0
  %460 = vmatpush2.bf16.msra.mxu0 0
  %461 = vmatprep.subr.bf16.mxu0 0
  %462 = vmatpush2.bf16.msra.mxu0 0
  %463 = vmatprep.subr.bf16.mxu0 0
  %464 = vmatpush2.bf16.msra.mxu0 0
  %465 = vmatprep.subr.bf16.mxu0 0
  %466 = vmatpush2.bf16.msra.mxu0 0
  %467 = vmatprep.subr.bf16.mxu0 0
  %468 = vmatpush2.bf16.msra.mxu0 0
  %469 = vmatprep.subr.bf16.mxu0 0
  %470 = vmatpush2.bf16.msra.mxu0 0
  %471 = vmatprep.mubr.bf16.mxu0 0
  %472 = vmatmul.mubr.bf16.gmra.mxu0 %v367
  %v473 = vpop.f32.mrf.mxu0
  %v474 = vadd.f32 0.0, %v473
  %v475 = vpop.f32.mrf.mxu0
  %v476 = vpop.f32.mrf.mxu0
  %v477 = vadd.f32 0.0, %v476
  %v478 = vpop.f32.mrf.mxu0
  %479 = vmatprep.mubr.bf16.mxu0 0
  %480 = vmatmul.mubr.bf16.gmra.mxu0 %v368
  %v481 = vpop.f32.mrf.mxu0
  %v482 = vadd.f32 0.0, %v481
  %v483 = vpop.f32.mrf.mxu0
  %v484 = vpop.f32.mrf.mxu0
  %v485 = vadd.f32 0.0, %v484
  %v486 = vpop.f32.mrf.mxu0
  %487 = vmatprep.mubr.bf16.mxu0 0
  %488 = vmatmul.mubr.bf16.gmra.mxu0 %v369
  %v489 = vpop.f32.mrf.mxu0
  %v490 = vadd.f32 0.0, %v489
  %v491 = vpop.f32.mrf.mxu0
  %v492 = vpop.f32.mrf.mxu0
  %v493 = vadd.f32 0.0, %v492
  %v494 = vpop.f32.mrf.mxu0
  %495 = vmatprep.mubr.bf16.mxu0 0
  %496 = vmatmul.mubr.bf16.gmra.mxu0 %v370
  %v497 = vpop.f32.mrf.mxu0
  %v498 = vadd.f32 0.0, %v497
  %v499 = vpop.f32.mrf.mxu0
  %v500 = vpop.f32.mrf.mxu0
  %v501 = vadd.f32 0.0, %v500
  %v502 = vpop.f32.mrf.mxu0
  %503 = vmatprep.mubr.bf16.mxu0 0
  %504 = vmatmul.mubr.bf16.gmra.mxu0 %v371
  %v505 = vpop.f32.mrf.mxu0
  %v506 = vadd.f32 0.0, %v505
  %v507 = vpop.f32.mrf.mxu0
  %v508 = vpop.f32.mrf.mxu0
  %v509 = vadd.f32 0.0, %v508
  %v510 = vpop.f32.mrf.mxu0
  %511 = vmatprep.mubr.bf16.mxu0 0
  %512 = vmatmul.mubr.bf16.gmra.mxu0 %v372
  %v513 = vpop.f32.mrf.mxu0
  %v514 = vadd.f32 0.0, %v513
  %v515 = vpop.f32.mrf.mxu0
  %v516 = vpop.f32.mrf.mxu0
  %v517 = vadd.f32 0.0, %v516
  %v518 = vpop.f32.mrf.mxu0
  %519 = vmatprep.mubr.bf16.mxu0 0
  %520 = vmatmul.mubr.bf16.gmra.mxu0 %v373
  %v521 = vpop.f32.mrf.mxu0
  %v522 = vadd.f32 0.0, %v521
  %v523 = vpop.f32.mrf.mxu0
  %v524 = vpop.f32.mrf.mxu0
  %v525 = vadd.f32 0.0, %v524
  %v526 = vpop.f32.mrf.mxu0
  %527 = vmatprep.mubr.bf16.mxu0 0
  %528 = vmatmul.mubr.bf16.gmra.mxu0 %v374
  %v529 = vpop.f32.mrf.mxu0
  %v530 = vadd.f32 0.0, %v529
  %v531 = vpop.f32.mrf.mxu0
  %v532 = vpop.f32.mrf.mxu0
  %v533 = vadd.f32 0.0, %v532
  %v534 = vpop.f32.mrf.mxu0
  %535 = vdwg.mxu0
  %v536 = vpack.c.bf16 %v477, %v474
  %v537 = vpack.c.bf16 %v485, %v482
  %v538 = vpack.c.bf16 %v493, %v490
  %v539 = vpack.c.bf16 %v501, %v498
  %v540 = vpack.c.bf16 %v509, %v506
  %v541 = vpack.c.bf16 %v517, %v514
  %v542 = vpack.c.bf16 %v525, %v522
  %v543 = vpack.c.bf16 %v533, %v530
  %v552 = vunpack.c.l.b16 %v536
  %v553 = vunpack.c.h.b16 %v536
  %v554 = vunpack.c.l.b16 %v537
  %v555 = vunpack.c.h.b16 %v537
  %v556 = vunpack.c.l.b16 %v538
  %v557 = vunpack.c.h.b16 %v538
  %v558 = vunpack.c.l.b16 %v539
  %v559 = vunpack.c.h.b16 %v539
  %v560 = vunpack.c.l.b16 %v540
  %v561 = vunpack.c.h.b16 %v540
  %v562 = vunpack.c.l.b16 %v541
  %v563 = vunpack.c.h.b16 %v541
  %v564 = vunpack.c.l.b16 %v542
  %v565 = vunpack.c.h.b16 %v542
  %v566 = vunpack.c.l.b16 %v543
  %v567 = vunpack.c.h.b16 %v543
  %v568 = vpack.c.b16 %v552, %v552
  %v569 = vpack.c.b16 %v553, %v553
  %v570 = vpack.c.b16 %v554, %v554
  %v571 = vpack.c.b16 %v555, %v555
  %v572 = vpack.c.b16 %v556, %v556
  %v573 = vpack.c.b16 %v557, %v557
  %v574 = vpack.c.b16 %v558, %v558
  %v575 = vpack.c.b16 %v559, %v559
  %v576 = vpack.c.b16 %v560, %v560
  %v577 = vpack.c.b16 %v561, %v561
  %v578 = vpack.c.b16 %v562, %v562
  %v579 = vpack.c.b16 %v563, %v563
  %v580 = vpack.c.b16 %v564, %v564
  %v581 = vpack.c.b16 %v565, %v565
  %v582 = vpack.c.b16 %v566, %v566
  %v583 = vpack.c.b16 %v567, %v567
  %600 = vst [vmem:[%s3] sm:$0xf] %v568
  %601 = vst [vmem:[%s3 + $0x4] sm:$0xf] %v569
  %602 = vst [vmem:[%s3 + $0x8] sm:$0xf] %v570
  %603 = vst [vmem:[%s3 + $0xc] sm:$0xf] %v571
  %604 = vst [vmem:[%s3 + $0x10] sm:$0xf] %v572
  %605 = vst [vmem:[%s3 + $0x14] sm:$0xf] %v573
  %606 = vst [vmem:[%s3 + $0x18] sm:$0xf] %v574
  %607 = vst [vmem:[%s3 + $0x1c] sm:$0xf] %v575
  %608 = vst [vmem:[%s3 + $0x20] sm:$0xf] %v576
  %609 = vst [vmem:[%s3 + $0x24] sm:$0xf] %v577
  %610 = vst [vmem:[%s3 + $0x28] sm:$0xf] %v578
  %611 = vst [vmem:[%s3 + $0x2c] sm:$0xf] %v579
  %612 = vst [vmem:[%s3 + $0x30] sm:$0xf] %v580
  %613 = vst [vmem:[%s3 + $0x34] sm:$0xf] %v581
  %614 = vst [vmem:[%s3 + $0x38] sm:$0xf] %v582
  %615 = vst [vmem:[%s3 + $0x3c] sm:$0xf] %v583
  // Predicated region
  $region14: #{_forward_impl.6} parent=0 // pred_check
    _
  $region15: #{_forward_impl.6} parent=0 // pred_check_branch
    %617 = sbr.rel (0) target = $region17
  $region16: #{_forward_impl.6} parent=0 // pred_region
    _
  $region17: #{_forward_impl.6} parent=0 // pred_fallthru
    _
  // Predicated region
  $region18: #{_forward_impl.6} parent=0 // pred_check
    _
  $region19: #{_forward_impl.6} parent=0 // pred_check_branch
    %619 = sbr.rel (0) target = $region21
  $region20: #{_forward_impl.6} parent=0 // pred_region
    _
  $region21: #{_forward_impl.6} parent=0 // pred_fallthru
    _

</llo_original>
